<compile_context>
chip_gen: v5e
topology: v5e:2x2
jax: 0.10.0
libtpu: 0.0.40
codegen_flags: <defaults>
</compile_context>

<pallas_src>
import math
import functools

import jax
import jax.numpy as jnp
from jax import lax
from jax.experimental import pallas as pl
from jax.experimental.pallas import tpu as pltpu


# ---------------------------------------------------------------------------
# Shared math: runs inside the Pallas kernel, and (with recip = 1/x) as the
# pure-JAX mirror reference.  Activations stay 2-D (tokens, features); the
# head-batched (nhead, T, hd) view only exists inside _attention.
# ---------------------------------------------------------------------------

def _mm(x, w):
    """(M, K) x (K, N) matmul; operands cast to the weight dtype (bf16), f32 accum."""
    return jnp.dot(x.astype(w.dtype), w, preferred_element_type=jnp.float32)


def _layer_norm(x, gamma, beta, eps=1e-5):
    mu = jnp.mean(x, axis=-1, keepdims=True)
    var = jnp.mean((x - mu) ** 2, axis=-1, keepdims=True)
    return (x - mu) * lax.rsqrt(var + eps) * gamma + beta


def _split_heads(x2d, nhead, hd):
    """(T, E) -> (nhead, T, hd): static within-vreg lane slices + one major-axis stack."""
    return jnp.stack([x2d[:, h * hd:(h + 1) * hd] for h in range(nhead)], axis=0)


def _attention(q, k, v, wo_heads, bo, nhead, hd, recip):
    """Head-batched attention. q: (Tq, E), k/v: (Tk, E) f32 (scale pre-folded into q).
    wo_heads: (nhead, hd, E) output-projection weight (bf16), bo: (1, E) f32."""
    mxu = wo_heads.dtype
    qh = _split_heads(q, nhead, hd).astype(mxu)            # (h, Tq, hd)
    kh = _split_heads(k, nhead, hd).astype(mxu)            # (h, Tk, hd)
    vh = _split_heads(v, nhead, hd).astype(mxu)            # (h, Tk, hd)

    s = jnp.einsum('hqd,hkd->hqk', qh, kh,
                   preferred_element_type=jnp.float32)     # (h, Tq, Tk) f32
    m = jnp.max(s, axis=-1, keepdims=True)
    e = jnp.exp(s - m)
    p = e * recip(jnp.sum(e, axis=-1, keepdims=True))      # softmax via reciprocal

    ctx = jnp.einsum('hqk,hkd->hqd', p.astype(mxu), vh,
                     preferred_element_type=jnp.float32)   # (h, Tq, hd) f32
    # Head merge folded into the output projection: out = sum_h ctx[h] @ Wo[h] + bo.
    o = jnp.einsum('hqd,hde->hqe', ctx.astype(mxu), wo_heads,
                   preferred_element_type=jnp.float32)     # (h, Tq, E)
    return jnp.sum(o, axis=0) + bo                         # (Tq, E) f32


def _decoder_math(nhead, recip, tgt, mem,
                  w_qkv_sa, b_qkv_sa, wo_sa, bo_sa,
                  w_q_ca, b_q_ca, w_kv_ca, b_kv_ca, wo_ca, bo_ca,
                  w1, b1, w2, b2,
                  n1g, n1b, n2g, n2b, n3g, n3b):
    E = tgt.shape[-1]
    hd = E // nhead

    # --- self attention (fused QKV; 1/sqrt(hd) folded into the Q columns) ---
    qkv = _mm(tgt, w_qkv_sa) + b_qkv_sa                    # (T, 3E)
    q, k, v = qkv[:, :E], qkv[:, E:2 * E], qkv[:, 2 * E:]
    sa = _attention(q, k, v, wo_sa, bo_sa, nhead, hd, recip)
    x = _layer_norm(tgt + sa, n1g, n1b)

    # --- cross attention (fused KV projection of memory) ---
    qc = _mm(x, w_q_ca) + b_q_ca                           # (T, E)
    kv = _mm(mem, w_kv_ca) + b_kv_ca                       # (S, 2E)
    kc, vc = kv[:, :E], kv[:, E:]
    ca = _attention(qc, kc, vc, wo_ca, bo_ca, nhead, hd, recip)
    x = _layer_norm(x + ca, n2g, n2b)

    # --- feed forward (ReLU) ---
    hmid = jnp.maximum(_mm(x, w1) + b1, 0.0)               # (T, dff)
    x = _layer_norm(x + _mm(hmid, w2) + b2, n3g, n3b)
    return x


# ---------------------------------------------------------------------------
# Pallas kernel + wrapper
# ---------------------------------------------------------------------------

def _decoder_layer_kernel(nhead, *refs):
    tgt_ref, mem_ref = refs[0], refs[1]
    out_ref = refs[-1]
    params = [r[...] for r in refs[2:-1]]
    recip = lambda d: pl.reciprocal(d, approx=True)        # EUP slot, mul not div
    out = _decoder_math(nhead, recip, tgt_ref[...], mem_ref[...], *params)
    out_ref[...] = out.astype(out_ref.dtype)


def prepare_params(raw_params, nhead, mxu_dtype=jnp.bfloat16):
    """Wrapper-side weight prep: transpose to (Din, Dout), fuse QKV / KV, fold the
    1/sqrt(head_dim) scale into Wq/bq, split Wo per head, cast matmul weights to bf16."""
    (sa_w, sa_b, sa_ow, sa_ob,
     ca_w, ca_b, ca_ow, ca_ob,
     l1w, l1b, l2w, l2b,
     n1g, n1b, n2g, n2b, n3g, n3b) = [p.astype(jnp.float32) for p in raw_params]
    E = sa_ow.shape[0]
    hd = E // nhead
    scale = 1.0 / math.sqrt(hd)

    # self-attention: fused (E, 3E), q-scale folded into weight + bias.
    w_qkv_sa = jnp.concatenate(
        [sa_w[:E] * scale, sa_w[E:2 * E], sa_w[2 * E:]], axis=0).T
    b_qkv_sa = jnp.concatenate(
        [sa_b[:, :E] * scale, sa_b[:, E:2 * E], sa_b[:, 2 * E:]], axis=1)
    wo_sa = sa_ow.T.reshape(nhead, hd, E)

    # cross-attention: separate Q (target) / fused KV (memory).
    w_q_ca = (ca_w[:E] * scale).T
    b_q_ca = ca_b[:, :E] * scale
    w_kv_ca = jnp.concatenate([ca_w[E:2 * E], ca_w[2 * E:]], axis=0).T
    b_kv_ca = jnp.concatenate([ca_b[:, E:2 * E], ca_b[:, 2 * E:]], axis=1)
    wo_ca = ca_ow.T.reshape(nhead, hd, E)

    w1, w2 = l1w.T, l2w.T

    cast = lambda w: w.astype(mxu_dtype)
    return [
        cast(w_qkv_sa), b_qkv_sa, cast(wo_sa), sa_ob,
        cast(w_q_ca), b_q_ca, cast(w_kv_ca), b_kv_ca, cast(wo_ca), ca_ob,
        cast(w1), l1b, cast(w2), l2b,
        n1g, n1b, n2g, n2b, n3g, n3b,
    ]


def decoder_layer_forward(tgt_tbe, mem_sbe, raw_params, nhead):
    """tgt_tbe: (T, B, E), mem_sbe: (S, B, E) — PyTorch (seq, batch, embed) layout."""
    params = prepare_params(raw_params, nhead)
    tgt = jnp.transpose(tgt_tbe, (1, 0, 2)).astype(jnp.float32)   # (B, T, E)
    mem = jnp.transpose(mem_sbe, (1, 0, 2)).astype(jnp.float32)   # (B, S, E)
    B, T, E = tgt.shape
    S = mem.shape[1]

    def rep_spec(shape):                    # weights resident across the batch grid
        nd = len(shape)
        return pl.BlockSpec(shape, lambda b: (0,) * nd)

    in_specs = (
        [pl.BlockSpec((None, T, E), lambda b: (b, 0, 0)),   # one batch element / step
         pl.BlockSpec((None, S, E), lambda b: (b, 0, 0))]
        + [rep_spec(p.shape) for p in params]
    )
    out_spec = pl.BlockSpec((None, T, E), lambda b: (b, 0, 0))

    out_bte = pl.pallas_call(
        functools.partial(_decoder_layer_kernel, nhead),
        out_shape=jax.ShapeDtypeStruct((B, T, E), jnp.float32),
        grid=(B,),
        in_specs=in_specs,
        out_specs=out_spec,
        compiler_params=pltpu.CompilerParams(
            dimension_semantics=("parallel",)),
    )(tgt, mem, *params)

    return jnp.transpose(out_bte, (1, 0, 2))


# ---------------------------------------------------------------------------
# References
# ---------------------------------------------------------------------------

def mirror_reference(tgt_tbe, mem_sbe, raw_params, nhead):
    """Pure-JAX evaluation of the exact kernel math (same bf16 operands),
    exact reciprocal in the softmax.  Validates the Pallas lowering."""
    params = prepare_params(raw_params, nhead)
    tgt = jnp.transpose(tgt_tbe, (1, 0, 2)).astype(jnp.float32)
    mem = jnp.transpose(mem_sbe, (1, 0, 2)).astype(jnp.float32)
    recip = lambda d: 1.0 / d
    outs = [_decoder_math(nhead, recip, tgt[b], mem[b], *params)
            for b in range(tgt.shape[0])]
    return jnp.transpose(jnp.stack(outs, axis=0), (1, 0, 2))


def torch_style_reference(tgt_tbe, mem_sbe, raw_params, nhead):
    """Independent full-f32 reference following torch.nn.TransformerDecoderLayer
    eval-mode math directly from the raw (PyTorch-layout) parameters."""
    (sa_w, sa_b, sa_ow, sa_ob, ca_w, ca_b, ca_ow, ca_ob,
     l1w, l1b, l2w, l2b, n1g, n1b, n2g, n2b, n3g, n3b) = [
        p.astype(jnp.float32) for p in raw_params]
    tgt = jnp.transpose(tgt_tbe, (1, 0, 2)).astype(jnp.float32)
    mem = jnp.transpose(mem_sbe, (1, 0, 2)).astype(jnp.float32)
    E = tgt.shape[-1]
    hd = E // nhead
    scale = 1.0 / math.sqrt(hd)

    def lin(x, w, b):                       # w: (Dout, Din) PyTorch convention
        return jnp.einsum('btd,ed->bte', x, w) + b

    def ln(x, g, b):
        mu = jnp.mean(x, -1, keepdims=True)
        var = jnp.mean((x - mu) ** 2, -1, keepdims=True)
        return (x - mu) * lax.rsqrt(var + 1e-5) * g + b

    def mha(xq, xkv, in_w, in_b, ow, ob):
        q = lin(xq, in_w[:E], in_b[:, :E]) * scale
        k = lin(xkv, in_w[E:2 * E], in_b[:, E:2 * E])
        v = lin(xkv, in_w[2 * E:], in_b[:, 2 * E:])
        heads = []
        for h in range(nhead):
            sl = slice(h * hd, (h + 1) * hd)
            s = jnp.einsum('bqd,bkd->bqk', q[..., sl], k[..., sl])
            p = jax.nn.softmax(s, axis=-1)
            heads.append(jnp.einsum('bqk,bkd->bqd', p, v[..., sl]))
        return lin(jnp.concatenate(heads, axis=-1), ow, ob)

    x = ln(tgt + mha(tgt, tgt, sa_w, sa_b, sa_ow, sa_ob), n1g, n1b)
    x = ln(x + mha(x, mem, ca_w, ca_b, ca_ow, ca_ob), n2g, n2b)
    hmid = jnp.maximum(lin(x, l1w, l1b), 0.0)
    x = ln(x + lin(hmid, l2w, l2b), n3g, n3b)
    return jnp.transpose(x, (1, 0, 2))


# ---------------------------------------------------------------------------
# Main
# ---------------------------------------------------------------------------

if __name__ == "__main__":
    d_model, nhead, dim_feedforward = 32, 4, 64
    T, S, B = 8, 8, 2

    key = jax.random.PRNGKey(0)
    ks = jax.random.split(key, 16)

    def rn(k, shape, scale=0.1):
        return (scale * jax.random.normal(k, shape)).astype(jnp.float32)

    raw_params = [
        # self_attn (PyTorch state_dict layout)
        rn(ks[0], (3 * d_model, d_model)),       # in_proj_weight
        rn(ks[1], (1, 3 * d_model)),             # in_proj_bias
        rn(ks[2], (d_model, d_model)),           # out_proj.weight
        rn(ks[3], (1, d_model)),                 # out_proj.bias
        # multihead_attn (cross attention)
        rn(ks[4], (3 * d_model, d_model)),
        rn(ks[5], (1, 3 * d_model)),
        rn(ks[6], (d_model, d_model)),
        rn(ks[7], (1, d_model)),
        # feed-forward
        rn(ks[8], (dim_feedforward, d_model)),   # linear1.weight
        rn(ks[9], (1, dim_feedforward)),         # linear1.bias
        rn(ks[10], (d_model, dim_feedforward)),  # linear2.weight
        rn(ks[11], (1, d_model)),                # linear2.bias
        # layer norms (PyTorch default init: gamma=1, beta=0)
        jnp.ones((1, d_model), jnp.float32), jnp.zeros((1, d_model), jnp.float32),
        jnp.ones((1, d_model), jnp.float32), jnp.zeros((1, d_model), jnp.float32),
        jnp.ones((1, d_model), jnp.float32), jnp.zeros((1, d_model), jnp.float32),
    ]

    tgt = rn(ks[12], (T, B, d_model), scale=1.0)
    memory = rn(ks[13], (S, B, d_model), scale=1.0)

    out = decoder_layer_forward(tgt, memory, raw_params, nhead)
    out = jax.block_until_ready(out)
    assert out.shape == (T, B, d_model), out.shape

    # (a) lowering check: same bf16-operand math evaluated by XLA (exact softmax recip).
    ref_mirror = mirror_reference(tgt, memory, raw_params, nhead)
    err_mirror = float(jnp.max(jnp.abs(out - ref_mirror)))
    assert jnp.allclose(out, ref_mirror, atol=5e-3, rtol=5e-3), err_mirror

    # (b) semantics check: full-f32 PyTorch-style math (bf16 MXU operands bound the error).
    ref_f32 = torch_style_reference(tgt, memory, raw_params, nhead)
    err_f32 = float(jnp.max(jnp.abs(out - ref_f32)))
    assert jnp.allclose(out, ref_f32, atol=5e-2, rtol=5e-2), err_f32

    print("KERNEL_OK")
</pallas_src>

<mosaic_0001>
module attributes {stable_mosaic.version = 11 : i64} {
  func.func @_decoder_layer_kernel(%arg0: i32, %arg1: memref<1x8x32xf32, #tpu.memory_space<vmem>>, %arg2: memref<1x8x32xf32, #tpu.memory_space<vmem>>, %arg3: memref<32x96xbf16, #tpu.memory_space<vmem>>, %arg4: memref<1x96xf32, #tpu.memory_space<vmem>>, %arg5: memref<4x8x32xbf16, #tpu.memory_space<vmem>>, %arg6: memref<1x32xf32, #tpu.memory_space<vmem>>, %arg7: memref<32x32xbf16, #tpu.memory_space<vmem>>, %arg8: memref<1x32xf32, #tpu.memory_space<vmem>>, %arg9: memref<32x64xbf16, #tpu.memory_space<vmem>>, %arg10: memref<1x64xf32, #tpu.memory_space<vmem>>, %arg11: memref<4x8x32xbf16, #tpu.memory_space<vmem>>, %arg12: memref<1x32xf32, #tpu.memory_space<vmem>>, %arg13: memref<32x64xbf16, #tpu.memory_space<vmem>>, %arg14: memref<1x64xf32, #tpu.memory_space<vmem>>, %arg15: memref<64x32xbf16, #tpu.memory_space<vmem>>, %arg16: memref<1x32xf32, #tpu.memory_space<vmem>>, %arg17: memref<1x32xf32, #tpu.memory_space<vmem>>, %arg18: memref<1x32xf32, #tpu.memory_space<vmem>>, %arg19: memref<1x32xf32, #tpu.memory_space<vmem>>, %arg20: memref<1x32xf32, #tpu.memory_space<vmem>>, %arg21: memref<1x32xf32, #tpu.memory_space<vmem>>, %arg22: memref<1x32xf32, #tpu.memory_space<vmem>>, %arg23: memref<1x8x32xf32, #tpu.memory_space<vmem>>) attributes {dimension_semantics = [#tpu.dimension_semantics<parallel>], iteration_bounds = array<i64: 2>, scalar_prefetch = 0 : i64, scratch_operands = 0 : i64, tpu.core_type = #tpu.core_type<tc>, window_params = [{transform_indices = @transform_0, window_bounds = array<i64: 1, 8, 32>}, {transform_indices = @transform_1, window_bounds = array<i64: 1, 8, 32>}, {pipeline_mode = #tpu.pipeline_mode<synchronous>, transform_indices = @transform_2, window_bounds = array<i64: 32, 96>}, {pipeline_mode = #tpu.pipeline_mode<synchronous>, transform_indices = @transform_3, window_bounds = array<i64: 1, 96>}, {pipeline_mode = #tpu.pipeline_mode<synchronous>, transform_indices = @transform_4, window_bounds = array<i64: 4, 8, 32>}, {pipeline_mode = #tpu.pipeline_mode<synchronous>, transform_indices = @transform_5, window_bounds = array<i64: 1, 32>}, {pipeline_mode = #tpu.pipeline_mode<synchronous>, transform_indices = @transform_6, window_bounds = array<i64: 32, 32>}, {pipeline_mode = #tpu.pipeline_mode<synchronous>, transform_indices = @transform_7, window_bounds = array<i64: 1, 32>}, {pipeline_mode = #tpu.pipeline_mode<synchronous>, transform_indices = @transform_8, window_bounds = array<i64: 32, 64>}, {pipeline_mode = #tpu.pipeline_mode<synchronous>, transform_indices = @transform_9, window_bounds = array<i64: 1, 64>}, {pipeline_mode = #tpu.pipeline_mode<synchronous>, transform_indices = @transform_10, window_bounds = array<i64: 4, 8, 32>}, {pipeline_mode = #tpu.pipeline_mode<synchronous>, transform_indices = @transform_11, window_bounds = array<i64: 1, 32>}, {pipeline_mode = #tpu.pipeline_mode<synchronous>, transform_indices = @transform_12, window_bounds = array<i64: 32, 64>}, {pipeline_mode = #tpu.pipeline_mode<synchronous>, transform_indices = @transform_13, window_bounds = array<i64: 1, 64>}, {pipeline_mode = #tpu.pipeline_mode<synchronous>, transform_indices = @transform_14, window_bounds = array<i64: 64, 32>}, {pipeline_mode = #tpu.pipeline_mode<synchronous>, transform_indices = @transform_15, window_bounds = array<i64: 1, 32>}, {pipeline_mode = #tpu.pipeline_mode<synchronous>, transform_indices = @transform_16, window_bounds = array<i64: 1, 32>}, {pipeline_mode = #tpu.pipeline_mode<synchronous>, transform_indices = @transform_17, window_bounds = array<i64: 1, 32>}, {pipeline_mode = #tpu.pipeline_mode<synchronous>, transform_indices = @transform_18, window_bounds = array<i64: 1, 32>}, {pipeline_mode = #tpu.pipeline_mode<synchronous>, transform_indices = @transform_19, window_bounds = array<i64: 1, 32>}, {pipeline_mode = #tpu.pipeline_mode<synchronous>, transform_indices = @transform_20, window_bounds = array<i64: 1, 32>}, {pipeline_mode = #tpu.pipeline_mode<synchronous>, transform_indices = @transform_21, window_bounds = array<i64: 1, 32>}, {transform_indices = @transform_22, window_bounds = array<i64: 1, 8, 32>}]} {
    %c0 = arith.constant 0 : index
    %c0_0 = arith.constant 0 : index
    %0 = vector.load %arg3[%c0, %c0_0] : memref<32x96xbf16, #tpu.memory_space<vmem>>, vector<32x96xbf16>
    %c0_1 = arith.constant 0 : index
    %c0_2 = arith.constant 0 : index
    %1 = vector.load %arg4[%c0_1, %c0_2] : memref<1x96xf32, #tpu.memory_space<vmem>>, vector<1x96xf32>
    %c0_3 = arith.constant 0 : index
    %c0_4 = arith.constant 0 : index
    %c0_5 = arith.constant 0 : index
    %2 = vector.load %arg5[%c0_3, %c0_4, %c0_5] : memref<4x8x32xbf16, #tpu.memory_space<vmem>>, vector<4x8x32xbf16>
    %c0_6 = arith.constant 0 : index
    %c0_7 = arith.constant 0 : index
    %3 = vector.load %arg6[%c0_6, %c0_7] : memref<1x32xf32, #tpu.memory_space<vmem>>, vector<1x32xf32>
    %c0_8 = arith.constant 0 : index
    %c0_9 = arith.constant 0 : index
    %4 = vector.load %arg7[%c0_8, %c0_9] : memref<32x32xbf16, #tpu.memory_space<vmem>>, vector<32x32xbf16>
    %c0_10 = arith.constant 0 : index
    %c0_11 = arith.constant 0 : index
    %5 = vector.load %arg8[%c0_10, %c0_11] : memref<1x32xf32, #tpu.memory_space<vmem>>, vector<1x32xf32>
    %c0_12 = arith.constant 0 : index
    %c0_13 = arith.constant 0 : index
    %6 = vector.load %arg9[%c0_12, %c0_13] : memref<32x64xbf16, #tpu.memory_space<vmem>>, vector<32x64xbf16>
    %c0_14 = arith.constant 0 : index
    %c0_15 = arith.constant 0 : index
    %7 = vector.load %arg10[%c0_14, %c0_15] : memref<1x64xf32, #tpu.memory_space<vmem>>, vector<1x64xf32>
    %c0_16 = arith.constant 0 : index
    %c0_17 = arith.constant 0 : index
    %c0_18 = arith.constant 0 : index
    %8 = vector.load %arg11[%c0_16, %c0_17, %c0_18] : memref<4x8x32xbf16, #tpu.memory_space<vmem>>, vector<4x8x32xbf16>
    %c0_19 = arith.constant 0 : index
    %c0_20 = arith.constant 0 : index
    %9 = vector.load %arg12[%c0_19, %c0_20] : memref<1x32xf32, #tpu.memory_space<vmem>>, vector<1x32xf32>
    %c0_21 = arith.constant 0 : index
    %c0_22 = arith.constant 0 : index
    %10 = vector.load %arg13[%c0_21, %c0_22] : memref<32x64xbf16, #tpu.memory_space<vmem>>, vector<32x64xbf16>
    %c0_23 = arith.constant 0 : index
    %c0_24 = arith.constant 0 : index
    %11 = vector.load %arg14[%c0_23, %c0_24] : memref<1x64xf32, #tpu.memory_space<vmem>>, vector<1x64xf32>
    %c0_25 = arith.constant 0 : index
    %c0_26 = arith.constant 0 : index
    %12 = vector.load %arg15[%c0_25, %c0_26] : memref<64x32xbf16, #tpu.memory_space<vmem>>, vector<64x32xbf16>
    %c0_27 = arith.constant 0 : index
    %c0_28 = arith.constant 0 : index
    %13 = vector.load %arg16[%c0_27, %c0_28] : memref<1x32xf32, #tpu.memory_space<vmem>>, vector<1x32xf32>
    %c0_29 = arith.constant 0 : index
    %c0_30 = arith.constant 0 : index
    %14 = vector.load %arg17[%c0_29, %c0_30] : memref<1x32xf32, #tpu.memory_space<vmem>>, vector<1x32xf32>
    %c0_31 = arith.constant 0 : index
    %c0_32 = arith.constant 0 : index
    %15 = vector.load %arg18[%c0_31, %c0_32] : memref<1x32xf32, #tpu.memory_space<vmem>>, vector<1x32xf32>
    %c0_33 = arith.constant 0 : index
    %c0_34 = arith.constant 0 : index
    %16 = vector.load %arg19[%c0_33, %c0_34] : memref<1x32xf32, #tpu.memory_space<vmem>>, vector<1x32xf32>
    %c0_35 = arith.constant 0 : index
    %c0_36 = arith.constant 0 : index
    %17 = vector.load %arg20[%c0_35, %c0_36] : memref<1x32xf32, #tpu.memory_space<vmem>>, vector<1x32xf32>
    %c0_37 = arith.constant 0 : index
    %c0_38 = arith.constant 0 : index
    %18 = vector.load %arg21[%c0_37, %c0_38] : memref<1x32xf32, #tpu.memory_space<vmem>>, vector<1x32xf32>
    %c0_39 = arith.constant 0 : index
    %c0_40 = arith.constant 0 : index
    %19 = vector.load %arg22[%c0_39, %c0_40] : memref<1x32xf32, #tpu.memory_space<vmem>>, vector<1x32xf32>
    %c0_41 = arith.constant 0 : index
    %c0_42 = arith.constant 0 : index
    %c0_43 = arith.constant 0 : index
    %20 = vector.load %arg1[%c0_41, %c0_42, %c0_43] : memref<1x8x32xf32, #tpu.memory_space<vmem>>, vector<1x8x32xf32>
    %21 = vector.shape_cast %20 : vector<1x8x32xf32> to vector<8x32xf32>
    %c0_44 = arith.constant 0 : index
    %c0_45 = arith.constant 0 : index
    %c0_46 = arith.constant 0 : index
    %22 = vector.load %arg2[%c0_44, %c0_45, %c0_46] : memref<1x8x32xf32, #tpu.memory_space<vmem>>, vector<1x8x32xf32>
    %23 = vector.shape_cast %22 : vector<1x8x32xf32> to vector<8x32xf32>
    %24 = arith.truncf %21 : vector<8x32xf32> to vector<8x32xbf16>
    %cst = arith.constant dense<0.000000e+00> : vector<8x96xf32>
    %25 = tpu.matmul %24, %0, %cst {dimension_numbers = #tpu.dot_dimension_numbers<[1], [0], [0], [1], [0, 0, 1, 1], [], []>} : vector<8x32xbf16>, vector<32x96xbf16>, vector<8x96xf32> -> vector<8x96xf32>
    %26 = vector.broadcast %1 : vector<1x96xf32> to vector<8x96xf32>
    %27 = arith.addf %25, %26 : vector<8x96xf32>
    %28 = vector.extract_strided_slice %27 {offsets = [0, 0], sizes = [8, 32], strides = [1, 1]} : vector<8x96xf32> to vector<8x32xf32>
    %29 = vector.extract_strided_slice %27 {offsets = [0, 32], sizes = [8, 32], strides = [1, 1]} : vector<8x96xf32> to vector<8x32xf32>
    %30 = vector.extract_strided_slice %27 {offsets = [0, 64], sizes = [8, 32], strides = [1, 1]} : vector<8x96xf32> to vector<8x32xf32>
    %31 = vector.extract_strided_slice %28 {offsets = [0, 0], sizes = [8, 8], strides = [1, 1]} : vector<8x32xf32> to vector<8x8xf32>
    %32 = vector.extract_strided_slice %28 {offsets = [0, 8], sizes = [8, 8], strides = [1, 1]} : vector<8x32xf32> to vector<8x8xf32>
    %33 = vector.extract_strided_slice %28 {offsets = [0, 16], sizes = [8, 8], strides = [1, 1]} : vector<8x32xf32> to vector<8x8xf32>
    %34 = vector.extract_strided_slice %28 {offsets = [0, 24], sizes = [8, 8], strides = [1, 1]} : vector<8x32xf32> to vector<8x8xf32>
    %35 = vector.shape_cast %31 : vector<8x8xf32> to vector<1x8x8xf32>
    %36 = vector.shape_cast %32 : vector<8x8xf32> to vector<1x8x8xf32>
    %37 = vector.shape_cast %33 : vector<8x8xf32> to vector<1x8x8xf32>
    %38 = vector.shape_cast %34 : vector<8x8xf32> to vector<1x8x8xf32>
    %39 = tpu.concatenate %35, %36, %37, %38 in 0 : vector<1x8x8xf32>, vector<1x8x8xf32>, vector<1x8x8xf32>, vector<1x8x8xf32> -> vector<4x8x8xf32>
    %40 = arith.truncf %39 : vector<4x8x8xf32> to vector<4x8x8xbf16>
    %41 = vector.extract_strided_slice %29 {offsets = [0, 0], sizes = [8, 8], strides = [1, 1]} : vector<8x32xf32> to vector<8x8xf32>
    %42 = vector.extract_strided_slice %29 {offsets = [0, 8], sizes = [8, 8], strides = [1, 1]} : vector<8x32xf32> to vector<8x8xf32>
    %43 = vector.extract_strided_slice %29 {offsets = [0, 16], sizes = [8, 8], strides = [1, 1]} : vector<8x32xf32> to vector<8x8xf32>
    %44 = vector.extract_strided_slice %29 {offsets = [0, 24], sizes = [8, 8], strides = [1, 1]} : vector<8x32xf32> to vector<8x8xf32>
    %45 = vector.shape_cast %41 : vector<8x8xf32> to vector<1x8x8xf32>
    %46 = vector.shape_cast %42 : vector<8x8xf32> to vector<1x8x8xf32>
    %47 = vector.shape_cast %43 : vector<8x8xf32> to vector<1x8x8xf32>
    %48 = vector.shape_cast %44 : vector<8x8xf32> to vector<1x8x8xf32>
    %49 = tpu.concatenate %45, %46, %47, %48 in 0 : vector<1x8x8xf32>, vector<1x8x8xf32>, vector<1x8x8xf32>, vector<1x8x8xf32> -> vector<4x8x8xf32>
    %50 = arith.truncf %49 : vector<4x8x8xf32> to vector<4x8x8xbf16>
    %51 = vector.extract_strided_slice %30 {offsets = [0, 0], sizes = [8, 8], strides = [1, 1]} : vector<8x32xf32> to vector<8x8xf32>
    %52 = vector.extract_strided_slice %30 {offsets = [0, 8], sizes = [8, 8], strides = [1, 1]} : vector<8x32xf32> to vector<8x8xf32>
    %53 = vector.extract_strided_slice %30 {offsets = [0, 16], sizes = [8, 8], strides = [1, 1]} : vector<8x32xf32> to vector<8x8xf32>
    %54 = vector.extract_strided_slice %30 {offsets = [0, 24], sizes = [8, 8], strides = [1, 1]} : vector<8x32xf32> to vector<8x8xf32>
    %55 = vector.shape_cast %51 : vector<8x8xf32> to vector<1x8x8xf32>
    %56 = vector.shape_cast %52 : vector<8x8xf32> to vector<1x8x8xf32>
    %57 = vector.shape_cast %53 : vector<8x8xf32> to vector<1x8x8xf32>
    %58 = vector.shape_cast %54 : vector<8x8xf32> to vector<1x8x8xf32>
    %59 = tpu.concatenate %55, %56, %57, %58 in 0 : vector<1x8x8xf32>, vector<1x8x8xf32>, vector<1x8x8xf32>, vector<1x8x8xf32> -> vector<4x8x8xf32>
    %60 = arith.truncf %59 : vector<4x8x8xf32> to vector<4x8x8xbf16>
    "tpu.trace_start"() <{level = 10 : i32, message = "hqd,hkd->hqk"}> : () -> ()
    %cst_47 = arith.constant dense<0.000000e+00> : vector<4x8x8xf32>
    %61 = tpu.matmul %40, %50, %cst_47 {dimension_numbers = #tpu.dot_dimension_numbers<[2], [2], [1], [1], [0, 0, 0, 1, 1, 1], [0], [0]>} : vector<4x8x8xbf16>, vector<4x8x8xbf16>, vector<4x8x8xf32> -> vector<4x8x8xf32>
    "tpu.trace_stop"() : () -> ()
    %cst_48 = arith.constant dense<0xFF800000> : vector<4x8xf32>
    %62 = vector.multi_reduction <maximumf>, %61, %cst_48 [2] : vector<4x8x8xf32> to vector<4x8xf32>
    %63 = vector.shape_cast %62 : vector<4x8xf32> to vector<4x8x1xf32>
    %64 = vector.broadcast %63 : vector<4x8x1xf32> to vector<4x8x8xf32>
    %65 = arith.subf %61, %64 : vector<4x8x8xf32>
    %66 = math.exp %65 : vector<4x8x8xf32>
    %cst_49 = arith.constant dense<0.000000e+00> : vector<4x8xf32>
    %67 = vector.multi_reduction <add>, %66, %cst_49 [2] : vector<4x8x8xf32> to vector<4x8xf32>
    %68 = vector.shape_cast %67 : vector<4x8xf32> to vector<4x8x1xf32>
    %69 = tpu.reciprocal %68 {approx = true} : vector<4x8x1xf32> -> vector<4x8x1xf32>
    %70 = vector.broadcast %69 : vector<4x8x1xf32> to vector<4x8x8xf32>
    %71 = arith.mulf %66, %70 : vector<4x8x8xf32>
    %72 = arith.truncf %71 : vector<4x8x8xf32> to vector<4x8x8xbf16>
    "tpu.trace_start"() <{level = 10 : i32, message = "hqk,hkd->hqd"}> : () -> ()
    %cst_50 = arith.constant dense<0.000000e+00> : vector<4x8x8xf32>
    %73 = tpu.matmul %72, %60, %cst_50 {dimension_numbers = #tpu.dot_dimension_numbers<[2], [1], [1], [2], [0, 0, 0, 1, 1, 2], [0], [0]>} : vector<4x8x8xbf16>, vector<4x8x8xbf16>, vector<4x8x8xf32> -> vector<4x8x8xf32>
    "tpu.trace_stop"() : () -> ()
    %74 = arith.truncf %73 : vector<4x8x8xf32> to vector<4x8x8xbf16>
    "tpu.trace_start"() <{level = 10 : i32, message = "hqd,hde->hqe"}> : () -> ()
    %cst_51 = arith.constant dense<0.000000e+00> : vector<4x8x32xf32>
    %75 = tpu.matmul %74, %2, %cst_51 {dimension_numbers = #tpu.dot_dimension_numbers<[2], [1], [1], [2], [0, 0, 0, 1, 1, 2], [0], [0]>} : vector<4x8x8xbf16>, vector<4x8x32xbf16>, vector<4x8x32xf32> -> vector<4x8x32xf32>
    "tpu.trace_stop"() : () -> ()
    %cst_52 = arith.constant dense<0.000000e+00> : vector<8x32xf32>
    %76 = vector.multi_reduction <add>, %75, %cst_52 [0] : vector<4x8x32xf32> to vector<8x32xf32>
    %77 = vector.broadcast %3 : vector<1x32xf32> to vector<8x32xf32>
    %78 = arith.addf %76, %77 : vector<8x32xf32>
    %79 = arith.addf %21, %78 : vector<8x32xf32>
    %cst_53 = arith.constant dense<0.000000e+00> : vector<8xf32>
    %80 = vector.multi_reduction <add>, %79, %cst_53 [1] : vector<8x32xf32> to vector<8xf32>
    %81 = vector.shape_cast %80 : vector<8xf32> to vector<8x1xf32>
    %cst_54 = arith.constant 3.200000e+01 : f32
    %82 = vector.broadcast %cst_54 : f32 to vector<8x1xf32>
    %83 = arith.divf %81, %82 : vector<8x1xf32>
    %84 = vector.broadcast %83 : vector<8x1xf32> to vector<8x32xf32>
    %85 = arith.subf %79, %84 : vector<8x32xf32>
    %86 = arith.mulf %85, %85 : vector<8x32xf32>
    %cst_55 = arith.constant dense<0.000000e+00> : vector<8xf32>
    %87 = vector.multi_reduction <add>, %86, %cst_55 [1] : vector<8x32xf32> to vector<8xf32>
    %88 = vector.shape_cast %87 : vector<8xf32> to vector<8x1xf32>
    %cst_56 = arith.constant 3.200000e+01 : f32
    %89 = vector.broadcast %cst_56 : f32 to vector<8x1xf32>
    %90 = arith.divf %88, %89 : vector<8x1xf32>
    %91 = vector.broadcast %83 : vector<8x1xf32> to vector<8x32xf32>
    %92 = arith.subf %79, %91 : vector<8x32xf32>
    %cst_57 = arith.constant 9.99999974E-6 : f32
    %93 = vector.broadcast %cst_57 : f32 to vector<8x1xf32>
    %94 = arith.addf %90, %93 : vector<8x1xf32>
    %95 = math.rsqrt %94 : vector<8x1xf32>
    %96 = vector.broadcast %95 : vector<8x1xf32> to vector<8x32xf32>
    %97 = arith.mulf %92, %96 : vector<8x32xf32>
    %98 = vector.broadcast %14 : vector<1x32xf32> to vector<8x32xf32>
    %99 = arith.mulf %97, %98 : vector<8x32xf32>
    %100 = vector.broadcast %15 : vector<1x32xf32> to vector<8x32xf32>
    %101 = arith.addf %99, %100 : vector<8x32xf32>
    %102 = arith.truncf %101 : vector<8x32xf32> to vector<8x32xbf16>
    %cst_58 = arith.constant dense<0.000000e+00> : vector<8x32xf32>
    %103 = tpu.matmul %102, %4, %cst_58 {dimension_numbers = #tpu.dot_dimension_numbers<[1], [0], [0], [1], [0, 0, 1, 1], [], []>} : vector<8x32xbf16>, vector<32x32xbf16>, vector<8x32xf32> -> vector<8x32xf32>
    %104 = vector.broadcast %5 : vector<1x32xf32> to vector<8x32xf32>
    %105 = arith.addf %103, %104 : vector<8x32xf32>
    %106 = arith.truncf %23 : vector<8x32xf32> to vector<8x32xbf16>
    %cst_59 = arith.constant dense<0.000000e+00> : vector<8x64xf32>
    %107 = tpu.matmul %106, %6, %cst_59 {dimension_numbers = #tpu.dot_dimension_numbers<[1], [0], [0], [1], [0, 0, 1, 1], [], []>} : vector<8x32xbf16>, vector<32x64xbf16>, vector<8x64xf32> -> vector<8x64xf32>
    %108 = vector.broadcast %7 : vector<1x64xf32> to vector<8x64xf32>
    %109 = arith.addf %107, %108 : vector<8x64xf32>
    %110 = vector.extract_strided_slice %109 {offsets = [0, 0], sizes = [8, 32], strides = [1, 1]} : vector<8x64xf32> to vector<8x32xf32>
    %111 = vector.extract_strided_slice %109 {offsets = [0, 32], sizes = [8, 32], strides = [1, 1]} : vector<8x64xf32> to vector<8x32xf32>
    %112 = vector.extract_strided_slice %105 {offsets = [0, 0], sizes = [8, 8], strides = [1, 1]} : vector<8x32xf32> to vector<8x8xf32>
    %113 = vector.extract_strided_slice %105 {offsets = [0, 8], sizes = [8, 8], strides = [1, 1]} : vector<8x32xf32> to vector<8x8xf32>
    %114 = vector.extract_strided_slice %105 {offsets = [0, 16], sizes = [8, 8], strides = [1, 1]} : vector<8x32xf32> to vector<8x8xf32>
    %115 = vector.extract_strided_slice %105 {offsets = [0, 24], sizes = [8, 8], strides = [1, 1]} : vector<8x32xf32> to vector<8x8xf32>
    %116 = vector.shape_cast %112 : vector<8x8xf32> to vector<1x8x8xf32>
    %117 = vector.shape_cast %113 : vector<8x8xf32> to vector<1x8x8xf32>
    %118 = vector.shape_cast %114 : vector<8x8xf32> to vector<1x8x8xf32>
    %119 = vector.shape_cast %115 : vector<8x8xf32> to vector<1x8x8xf32>
    %120 = tpu.concatenate %116, %117, %118, %119 in 0 : vector<1x8x8xf32>, vector<1x8x8xf32>, vector<1x8x8xf32>, vector<1x8x8xf32> -> vector<4x8x8xf32>
    %121 = arith.truncf %120 : vector<4x8x8xf32> to vector<4x8x8xbf16>
    %122 = vector.extract_strided_slice %110 {offsets = [0, 0], sizes = [8, 8], strides = [1, 1]} : vector<8x32xf32> to vector<8x8xf32>
    %123 = vector.extract_strided_slice %110 {offsets = [0, 8], sizes = [8, 8], strides = [1, 1]} : vector<8x32xf32> to vector<8x8xf32>
    %124 = vector.extract_strided_slice %110 {offsets = [0, 16], sizes = [8, 8], strides = [1, 1]} : vector<8x32xf32> to vector<8x8xf32>
    %125 = vector.extract_strided_slice %110 {offsets = [0, 24], sizes = [8, 8], strides = [1, 1]} : vector<8x32xf32> to vector<8x8xf32>
    %126 = vector.shape_cast %122 : vector<8x8xf32> to vector<1x8x8xf32>
    %127 = vector.shape_cast %123 : vector<8x8xf32> to vector<1x8x8xf32>
    %128 = vector.shape_cast %124 : vector<8x8xf32> to vector<1x8x8xf32>
    %129 = vector.shape_cast %125 : vector<8x8xf32> to vector<1x8x8xf32>
    %130 = tpu.concatenate %126, %127, %128, %129 in 0 : vector<1x8x8xf32>, vector<1x8x8xf32>, vector<1x8x8xf32>, vector<1x8x8xf32> -> vector<4x8x8xf32>
    %131 = arith.truncf %130 : vector<4x8x8xf32> to vector<4x8x8xbf16>
    %132 = vector.extract_strided_slice %111 {offsets = [0, 0], sizes = [8, 8], strides = [1, 1]} : vector<8x32xf32> to vector<8x8xf32>
    %133 = vector.extract_strided_slice %111 {offsets = [0, 8], sizes = [8, 8], strides = [1, 1]} : vector<8x32xf32> to vector<8x8xf32>
    %134 = vector.extract_strided_slice %111 {offsets = [0, 16], sizes = [8, 8], strides = [1, 1]} : vector<8x32xf32> to vector<8x8xf32>
    %135 = vector.extract_strided_slice %111 {offsets = [0, 24], sizes = [8, 8], strides = [1, 1]} : vector<8x32xf32> to vector<8x8xf32>
    %136 = vector.shape_cast %132 : vector<8x8xf32> to vector<1x8x8xf32>
    %137 = vector.shape_cast %133 : vector<8x8xf32> to vector<1x8x8xf32>
    %138 = vector.shape_cast %134 : vector<8x8xf32> to vector<1x8x8xf32>
    %139 = vector.shape_cast %135 : vector<8x8xf32> to vector<1x8x8xf32>
    %140 = tpu.concatenate %136, %137, %138, %139 in 0 : vector<1x8x8xf32>, vector<1x8x8xf32>, vector<1x8x8xf32>, vector<1x8x8xf32> -> vector<4x8x8xf32>
    %141 = arith.truncf %140 : vector<4x8x8xf32> to vector<4x8x8xbf16>
    "tpu.trace_start"() <{level = 10 : i32, message = "hqd,hkd->hqk"}> : () -> ()
    %cst_60 = arith.constant dense<0.000000e+00> : vector<4x8x8xf32>
    %142 = tpu.matmul %121, %131, %cst_60 {dimension_numbers = #tpu.dot_dimension_numbers<[2], [2], [1], [1], [0, 0, 0, 1, 1, 1], [0], [0]>} : vector<4x8x8xbf16>, vector<4x8x8xbf16>, vector<4x8x8xf32> -> vector<4x8x8xf32>
    "tpu.trace_stop"() : () -> ()
    %cst_61 = arith.constant dense<0xFF800000> : vector<4x8xf32>
    %143 = vector.multi_reduction <maximumf>, %142, %cst_61 [2] : vector<4x8x8xf32> to vector<4x8xf32>
    %144 = vector.shape_cast %143 : vector<4x8xf32> to vector<4x8x1xf32>
    %145 = vector.broadcast %144 : vector<4x8x1xf32> to vector<4x8x8xf32>
    %146 = arith.subf %142, %145 : vector<4x8x8xf32>
    %147 = math.exp %146 : vector<4x8x8xf32>
    %cst_62 = arith.constant dense<0.000000e+00> : vector<4x8xf32>
    %148 = vector.multi_reduction <add>, %147, %cst_62 [2] : vector<4x8x8xf32> to vector<4x8xf32>
    %149 = vector.shape_cast %148 : vector<4x8xf32> to vector<4x8x1xf32>
    %150 = tpu.reciprocal %149 {approx = true} : vector<4x8x1xf32> -> vector<4x8x1xf32>
    %151 = vector.broadcast %150 : vector<4x8x1xf32> to vector<4x8x8xf32>
    %152 = arith.mulf %147, %151 : vector<4x8x8xf32>
    %153 = arith.truncf %152 : vector<4x8x8xf32> to vector<4x8x8xbf16>
    "tpu.trace_start"() <{level = 10 : i32, message = "hqk,hkd->hqd"}> : () -> ()
    %cst_63 = arith.constant dense<0.000000e+00> : vector<4x8x8xf32>
    %154 = tpu.matmul %153, %141, %cst_63 {dimension_numbers = #tpu.dot_dimension_numbers<[2], [1], [1], [2], [0, 0, 0, 1, 1, 2], [0], [0]>} : vector<4x8x8xbf16>, vector<4x8x8xbf16>, vector<4x8x8xf32> -> vector<4x8x8xf32>
    "tpu.trace_stop"() : () -> ()
    %155 = arith.truncf %154 : vector<4x8x8xf32> to vector<4x8x8xbf16>
    "tpu.trace_start"() <{level = 10 : i32, message = "hqd,hde->hqe"}> : () -> ()
    %cst_64 = arith.constant dense<0.000000e+00> : vector<4x8x32xf32>
    %156 = tpu.matmul %155, %8, %cst_64 {dimension_numbers = #tpu.dot_dimension_numbers<[2], [1], [1], [2], [0, 0, 0, 1, 1, 2], [0], [0]>} : vector<4x8x8xbf16>, vector<4x8x32xbf16>, vector<4x8x32xf32> -> vector<4x8x32xf32>
    "tpu.trace_stop"() : () -> ()
    %cst_65 = arith.constant dense<0.000000e+00> : vector<8x32xf32>
    %157 = vector.multi_reduction <add>, %156, %cst_65 [0] : vector<4x8x32xf32> to vector<8x32xf32>
    %158 = vector.broadcast %9 : vector<1x32xf32> to vector<8x32xf32>
    %159 = arith.addf %157, %158 : vector<8x32xf32>
    %160 = arith.addf %101, %159 : vector<8x32xf32>
    %cst_66 = arith.constant dense<0.000000e+00> : vector<8xf32>
    %161 = vector.multi_reduction <add>, %160, %cst_66 [1] : vector<8x32xf32> to vector<8xf32>
    %162 = vector.shape_cast %161 : vector<8xf32> to vector<8x1xf32>
    %cst_67 = arith.constant 3.200000e+01 : f32
    %163 = vector.broadcast %cst_67 : f32 to vector<8x1xf32>
    %164 = arith.divf %162, %163 : vector<8x1xf32>
    %165 = vector.broadcast %164 : vector<8x1xf32> to vector<8x32xf32>
    %166 = arith.subf %160, %165 : vector<8x32xf32>
    %167 = arith.mulf %166, %166 : vector<8x32xf32>
    %cst_68 = arith.constant dense<0.000000e+00> : vector<8xf32>
    %168 = vector.multi_reduction <add>, %167, %cst_68 [1] : vector<8x32xf32> to vector<8xf32>
    %169 = vector.shape_cast %168 : vector<8xf32> to vector<8x1xf32>
    %cst_69 = arith.constant 3.200000e+01 : f32
    %170 = vector.broadcast %cst_69 : f32 to vector<8x1xf32>
    %171 = arith.divf %169, %170 : vector<8x1xf32>
    %172 = vector.broadcast %164 : vector<8x1xf32> to vector<8x32xf32>
    %173 = arith.subf %160, %172 : vector<8x32xf32>
    %cst_70 = arith.constant 9.99999974E-6 : f32
    %174 = vector.broadcast %cst_70 : f32 to vector<8x1xf32>
    %175 = arith.addf %171, %174 : vector<8x1xf32>
    %176 = math.rsqrt %175 : vector<8x1xf32>
    %177 = vector.broadcast %176 : vector<8x1xf32> to vector<8x32xf32>
    %178 = arith.mulf %173, %177 : vector<8x32xf32>
    %179 = vector.broadcast %16 : vector<1x32xf32> to vector<8x32xf32>
    %180 = arith.mulf %178, %179 : vector<8x32xf32>
    %181 = vector.broadcast %17 : vector<1x32xf32> to vector<8x32xf32>
    %182 = arith.addf %180, %181 : vector<8x32xf32>
    %183 = arith.truncf %182 : vector<8x32xf32> to vector<8x32xbf16>
    %cst_71 = arith.constant dense<0.000000e+00> : vector<8x64xf32>
    %184 = tpu.matmul %183, %10, %cst_71 {dimension_numbers = #tpu.dot_dimension_numbers<[1], [0], [0], [1], [0, 0, 1, 1], [], []>} : vector<8x32xbf16>, vector<32x64xbf16>, vector<8x64xf32> -> vector<8x64xf32>
    %185 = vector.broadcast %11 : vector<1x64xf32> to vector<8x64xf32>
    %186 = arith.addf %184, %185 : vector<8x64xf32>
    %cst_72 = arith.constant 0.000000e+00 : f32
    %187 = vector.broadcast %cst_72 : f32 to vector<8x64xf32>
    %188 = arith.maximumf %186, %187 : vector<8x64xf32>
    %189 = arith.truncf %188 : vector<8x64xf32> to vector<8x64xbf16>
    %cst_73 = arith.constant dense<0.000000e+00> : vector<8x32xf32>
    %190 = tpu.matmul %189, %12, %cst_73 {dimension_numbers = #tpu.dot_dimension_numbers<[1], [0], [0], [1], [0, 0, 1, 1], [], []>} : vector<8x64xbf16>, vector<64x32xbf16>, vector<8x32xf32> -> vector<8x32xf32>
    %191 = arith.addf %182, %190 : vector<8x32xf32>
    %192 = vector.broadcast %13 : vector<1x32xf32> to vector<8x32xf32>
    %193 = arith.addf %191, %192 : vector<8x32xf32>
    %cst_74 = arith.constant dense<0.000000e+00> : vector<8xf32>
    %194 = vector.multi_reduction <add>, %193, %cst_74 [1] : vector<8x32xf32> to vector<8xf32>
    %195 = vector.shape_cast %194 : vector<8xf32> to vector<8x1xf32>
    %cst_75 = arith.constant 3.200000e+01 : f32
    %196 = vector.broadcast %cst_75 : f32 to vector<8x1xf32>
    %197 = arith.divf %195, %196 : vector<8x1xf32>
    %198 = vector.broadcast %197 : vector<8x1xf32> to vector<8x32xf32>
    %199 = arith.subf %193, %198 : vector<8x32xf32>
    %200 = arith.mulf %199, %199 : vector<8x32xf32>
    %cst_76 = arith.constant dense<0.000000e+00> : vector<8xf32>
    %201 = vector.multi_reduction <add>, %200, %cst_76 [1] : vector<8x32xf32> to vector<8xf32>
    %202 = vector.shape_cast %201 : vector<8xf32> to vector<8x1xf32>
    %cst_77 = arith.constant 3.200000e+01 : f32
    %203 = vector.broadcast %cst_77 : f32 to vector<8x1xf32>
    %204 = arith.divf %202, %203 : vector<8x1xf32>
    %205 = vector.broadcast %197 : vector<8x1xf32> to vector<8x32xf32>
    %206 = arith.subf %193, %205 : vector<8x32xf32>
    %cst_78 = arith.constant 9.99999974E-6 : f32
    %207 = vector.broadcast %cst_78 : f32 to vector<8x1xf32>
    %208 = arith.addf %204, %207 : vector<8x1xf32>
    %209 = math.rsqrt %208 : vector<8x1xf32>
    %210 = vector.broadcast %209 : vector<8x1xf32> to vector<8x32xf32>
    %211 = arith.mulf %206, %210 : vector<8x32xf32>
    %212 = vector.broadcast %18 : vector<1x32xf32> to vector<8x32xf32>
    %213 = arith.mulf %211, %212 : vector<8x32xf32>
    %214 = vector.broadcast %19 : vector<1x32xf32> to vector<8x32xf32>
    %215 = arith.addf %213, %214 : vector<8x32xf32>
    %c0_79 = arith.constant 0 : index
    %c0_80 = arith.constant 0 : index
    %c0_81 = arith.constant 0 : index
    %216 = vector.load %arg23[%c0_79, %c0_80, %c0_81] : memref<1x8x32xf32, #tpu.memory_space<vmem>>, vector<1x8x32xf32>
    %217 = vector.shape_cast %216 : vector<1x8x32xf32> to vector<8x32xf32>
    %218 = vector.shape_cast %215 : vector<8x32xf32> to vector<1x8x32xf32>
    tpu.vector_store %arg23[%c0_79, %c0_80, %c0_81], %218 {strides = array<i32>} : memref<1x8x32xf32, #tpu.memory_space<vmem>>, vector<1x8x32xf32>,
    return
  }
  func.func @transform_0(%arg0: i32) -> (i32, i32, i32) {
    %c0_i32 = arith.constant 0 : i32
    %c0_i32_0 = arith.constant 0 : i32
    %c0_i32_1 = arith.constant 0 : i32
    return %arg0, %c0_i32, %c0_i32_0 : i32, i32, i32
  }
  func.func @transform_1(%arg0: i32) -> (i32, i32, i32) {
    %c0_i32 = arith.constant 0 : i32
    %c0_i32_0 = arith.constant 0 : i32
    %c0_i32_1 = arith.constant 0 : i32
    return %arg0, %c0_i32, %c0_i32_0 : i32, i32, i32
  }
  func.func @transform_2(%arg0: i32) -> (i32, i32) {
    %c0_i32 = arith.constant 0 : i32
    %c0_i32_0 = arith.constant 0 : i32
    %c0_i32_1 = arith.constant 0 : i32
    return %c0_i32, %c0_i32_0 : i32, i32
  }
  func.func @transform_3(%arg0: i32) -> (i32, i32) {
    %c0_i32 = arith.constant 0 : i32
    %c0_i32_0 = arith.constant 0 : i32
    %c0_i32_1 = arith.constant 0 : i32
    return %c0_i32, %c0_i32_0 : i32, i32
  }
  func.func @transform_4(%arg0: i32) -> (i32, i32, i32) {
    %c0_i32 = arith.constant 0 : i32
    %c0_i32_0 = arith.constant 0 : i32
    %c0_i32_1 = arith.constant 0 : i32
    %c0_i32_2 = arith.constant 0 : i32
    return %c0_i32, %c0_i32_0, %c0_i32_1 : i32, i32, i32
  }
  func.func @transform_5(%arg0: i32) -> (i32, i32) {
    %c0_i32 = arith.constant 0 : i32
    %c0_i32_0 = arith.constant 0 : i32
    %c0_i32_1 = arith.constant 0 : i32
    return %c0_i32, %c0_i32_0 : i32, i32
  }
  func.func @transform_6(%arg0: i32) -> (i32, i32) {
    %c0_i32 = arith.constant 0 : i32
    %c0_i32_0 = arith.constant 0 : i32
    %c0_i32_1 = arith.constant 0 : i32
    return %c0_i32, %c0_i32_0 : i32, i32
  }
  func.func @transform_7(%arg0: i32) -> (i32, i32) {
    %c0_i32 = arith.constant 0 : i32
    %c0_i32_0 = arith.constant 0 : i32
    %c0_i32_1 = arith.constant 0 : i32
    return %c0_i32, %c0_i32_0 : i32, i32
  }
  func.func @transform_8(%arg0: i32) -> (i32, i32) {
    %c0_i32 = arith.constant 0 : i32
    %c0_i32_0 = arith.constant 0 : i32
    %c0_i32_1 = arith.constant 0 : i32
    return %c0_i32, %c0_i32_0 : i32, i32
  }
  func.func @transform_9(%arg0: i32) -> (i32, i32) {
    %c0_i32 = arith.constant 0 : i32
    %c0_i32_0 = arith.constant 0 : i32
    %c0_i32_1 = arith.constant 0 : i32
    return %c0_i32, %c0_i32_0 : i32, i32
  }
  func.func @transform_10(%arg0: i32) -> (i32, i32, i32) {
    %c0_i32 = arith.constant 0 : i32
    %c0_i32_0 = arith.constant 0 : i32
    %c0_i32_1 = arith.constant 0 : i32
    %c0_i32_2 = arith.constant 0 : i32
    return %c0_i32, %c0_i32_0, %c0_i32_1 : i32, i32, i32
  }
  func.func @transform_11(%arg0: i32) -> (i32, i32) {
    %c0_i32 = arith.constant 0 : i32
    %c0_i32_0 = arith.constant 0 : i32
    %c0_i32_1 = arith.constant 0 : i32
    return %c0_i32, %c0_i32_0 : i32, i32
  }
  func.func @transform_12(%arg0: i32) -> (i32, i32) {
    %c0_i32 = arith.constant 0 : i32
    %c0_i32_0 = arith.constant 0 : i32
    %c0_i32_1 = arith.constant 0 : i32
    return %c0_i32, %c0_i32_0 : i32, i32
  }
  func.func @transform_13(%arg0: i32) -> (i32, i32) {
    %c0_i32 = arith.constant 0 : i32
    %c0_i32_0 = arith.constant 0 : i32
    %c0_i32_1 = arith.constant 0 : i32
    return %c0_i32, %c0_i32_0 : i32, i32
  }
  func.func @transform_14(%arg0: i32) -> (i32, i32) {
    %c0_i32 = arith.constant 0 : i32
    %c0_i32_0 = arith.constant 0 : i32
    %c0_i32_1 = arith.constant 0 : i32
    return %c0_i32, %c0_i32_0 : i32, i32
  }
  func.func @transform_15(%arg0: i32) -> (i32, i32) {
    %c0_i32 = arith.constant 0 : i32
    %c0_i32_0 = arith.constant 0 : i32
    %c0_i32_1 = arith.constant 0 : i32
    return %c0_i32, %c0_i32_0 : i32, i32
  }
  func.func @transform_16(%arg0: i32) -> (i32, i32) {
    %c0_i32 = arith.constant 0 : i32
    %c0_i32_0 = arith.constant 0 : i32
    %c0_i32_1 = arith.constant 0 : i32
    return %c0_i32, %c0_i32_0 : i32, i32
  }
  func.func @transform_17(%arg0: i32) -> (i32, i32) {
    %c0_i32 = arith.constant 0 : i32
    %c0_i32_0 = arith.constant 0 : i32
    %c0_i32_1 = arith.constant 0 : i32
    return %c0_i32, %c0_i32_0 : i32, i32
  }
  func.func @transform_18(%arg0: i32) -> (i32, i32) {
    %c0_i32 = arith.constant 0 : i32
    %c0_i32_0 = arith.constant 0 : i32
    %c0_i32_1 = arith.constant 0 : i32
    return %c0_i32, %c0_i32_0 : i32, i32
  }
  func.func @transform_19(%arg0: i32) -> (i32, i32) {
    %c0_i32 = arith.constant 0 : i32
    %c0_i32_0 = arith.constant 0 : i32
    %c0_i32_1 = arith.constant 0 : i32
    return %c0_i32, %c0_i32_0 : i32, i32
  }
  func.func @transform_20(%arg0: i32) -> (i32, i32) {
    %c0_i32 = arith.constant 0 : i32
    %c0_i32_0 = arith.constant 0 : i32
    %c0_i32_1 = arith.constant 0 : i32
    return %c0_i32, %c0_i32_0 : i32, i32
  }
  func.func @transform_21(%arg0: i32) -> (i32, i32) {
    %c0_i32 = arith.constant 0 : i32
    %c0_i32_0 = arith.constant 0 : i32
    %c0_i32_1 = arith.constant 0 : i32
    return %c0_i32, %c0_i32_0 : i32, i32
  }
  func.func @transform_22(%arg0: i32) -> (i32, i32, i32) {
    %c0_i32 = arith.constant 0 : i32
    %c0_i32_0 = arith.constant 0 : i32
    %c0_i32_1 = arith.constant 0 : i32
    return %arg0, %c0_i32, %c0_i32_0 : i32, i32, i32
  }
}

</mosaic_0001>

<llo_original>
// kernel: tpu_custom_call.1
$region0: #{tpu_custom_call.1}
  #allocation0 [shape = 'u32[]', space=smem, size = 0x4, offset = 0x4, fixed_abs, tag = 'smem constant byte address 0x4 - core index']
  #allocation1 [shape = 'u32[72,128]{1,0:T(1,128)}', space=vmem, size = 0x9000, scoped, tag = 'internal scratch']
  %s0 = inlined_call_operand.vmem [shape: f32[2,8,32], index: 0, kind: input, shape index: {}]
  %s1 = inlined_call_operand.vmem [shape: f32[2,8,32], index: 1, kind: input, shape index: {}]
  %s2 = inlined_call_operand.vmem [shape: bf16[32,96], index: 2, kind: input, shape index: {}]
  %s3 = inlined_call_operand.vmem [shape: f32[1,96], index: 3, kind: input, shape index: {}]
  %s4 = inlined_call_operand.hbm [shape: bf16[4,8,32], index: 4, kind: input, shape index: {}]
  %s5 = inlined_call_operand.vmem [shape: f32[1,32], index: 5, kind: input, shape index: {}]
  %s6 = inlined_call_operand.hbm [shape: bf16[32,32], index: 6, kind: input, shape index: {}]
  %s7 = inlined_call_operand.vmem [shape: f32[1,32], index: 7, kind: input, shape index: {}]
  %s8 = inlined_call_operand.hbm [shape: bf16[32,64], index: 8, kind: input, shape index: {}]
  %s9 = inlined_call_operand.vmem [shape: f32[1,64], index: 9, kind: input, shape index: {}]
  %s10 = inlined_call_operand.hbm [shape: bf16[4,8,32], index: 10, kind: input, shape index: {}]
  %s11 = inlined_call_operand.vmem [shape: f32[1,32], index: 11, kind: input, shape index: {}]
  %s12 = inlined_call_operand.hbm [shape: bf16[32,64], index: 12, kind: input, shape index: {}]
  %s13 = inlined_call_operand.vmem [shape: f32[1,64], index: 13, kind: input, shape index: {}]
  %s14 = inlined_call_operand.vmem [shape: bf16[64,32], index: 14, kind: input, shape index: {}]
  %s15 = inlined_call_operand.vmem [shape: f32[1,32], index: 15, kind: input, shape index: {}]
  %s16 = inlined_call_operand.vmem [shape: f32[1,32], index: 16, kind: input, shape index: {}]
  %s17 = inlined_call_operand.vmem [shape: f32[1,32], index: 17, kind: input, shape index: {}]
  %s18 = inlined_call_operand.vmem [shape: f32[1,32], index: 18, kind: input, shape index: {}]
  %s19 = inlined_call_operand.vmem [shape: f32[1,32], index: 19, kind: input, shape index: {}]
  %s20 = inlined_call_operand.vmem [shape: f32[1,32], index: 20, kind: input, shape index: {}]
  %s21 = inlined_call_operand.vmem [shape: f32[1,32], index: 21, kind: input, shape index: {}]
  %s22 = inlined_call_operand.hbm [shape: f32[2,8,32], index: 22, kind: output, shape index: {}]
  %s23 = sld [smem:[#allocation0]]
  $region141: #{tpu_custom_call.1} parent=0
    _
  %s25 = ssub.s32 1, %s23
  %s26 = scalar_select 0, %s25, %s23
  $region1: #{tpu_custom_call.1} parent=0
    #allocation2 [shape = 'u8[8192]{0}', space=vmem, size = 0x2000, scoped, tag = 'input window, operand 4, single buffered']
    #allocation3 [shape = 's32[2]{0}', space=sflag, size = 0x8, scoped, tag = 'scoped memory for tpu_custom_call.1']
    #allocation4 [shape = 's32[2]{0}', space=sflag, size = 0x8, scoped, tag = 'scoped memory for tpu_custom_call.1']
    #allocation5 [shape = 'u8[8192]{0}', space=vmem, size = 0x2000, scoped, tag = 'input window, operand 6, single buffered']
    #allocation6 [shape = 's32[1]{0}', space=sflag, size = 0x4, scoped, tag = 'scoped memory for tpu_custom_call.1']
    #allocation7 [shape = 'u8[8192]{0}', space=vmem, size = 0x2000, scoped, tag = 'input window, operand 8, single buffered']
    #allocation8 [shape = 'u8[8192]{0}', space=vmem, size = 0x2000, scoped, tag = 'input window, operand 10, single buffered']
    #allocation9 [shape = 's32[1]{0}', space=sflag, size = 0x4, scoped, tag = 'scoped memory for tpu_custom_call.1']
    #allocation10 [shape = 'u8[8192]{0}', space=vmem, size = 0x2000, scoped, tag = 'input window, operand 12, single buffered']
    #allocation11 [shape = 'u8[8192]{0}', space=vmem, size = 0x2000, scoped, tag = 'output window, operand 0']
    %27 = vsyncpa [#allocation3], 0
    %28 = vsyncpa [#allocation6], 0
    %29 = vsyncpa [#allocation9], 0
    %30 = vsyncpa [#allocation4], 0
    %s31 = scalar_lea.sflag [#allocation4], 1
    %32 = vsyncpa %s31, 0
    loop: start=0, step=1, limit=4
    $region2: #{tpu_custom_call.1} parent=1 // loop_pre_header
      _
    $region3: #{tpu_custom_call.1} parent=1 // loop_header
      %s34 = sphi 0, %s38
      %p35 = scmp.ge.s32.totalorder %s34, 4
      %s44 = sphi 0, %s46
      %s47 = sphi 0, %s44
      %s48 = sphi 0, %s47
      %s64 = sphi 0, %s48
      %s70 = sphi 0, %s72
      %s73 = sphi 0, %s70
      %s74 = sphi 0, %s73
      %s90 = sphi 0, %s74
      %s94 = sphi 0, %s94
      %s96 = sphi 0, %s94
      %s97 = sphi 0, %s96
      %s111 = sphi 0, %s97
      %s115 = sphi 0, %s115
      %s117 = sphi 0, %s115
      %s118 = sphi 0, %s117
      %s132 = sphi 0, %s118
      %s136 = sphi 0, %s136
      %s138 = sphi 0, %s136
      %s139 = sphi 0, %s138
      %s153 = sphi 0, %s139
      %s157 = sphi 0, %s157
      %s159 = sphi 0, %s157
      %s160 = sphi 0, %s159
      %s174 = sphi 0, %s160
      %s178 = sphi 0, %s178
      %s180 = sphi 0, %s178
      %s181 = sphi 0, %s180
      %s195 = sphi 0, %s181
      %s199 = sphi 0, %s199
      %s201 = sphi 0, %s199
      %s202 = sphi 0, %s201
      %s216 = sphi 0, %s202
      %s220 = sphi 0, %s220
      %s222 = sphi 0, %s220
      %s223 = sphi 0, %s222
      %s237 = sphi 0, %s223
      %s241 = sphi 0, %s241
      %s243 = sphi 0, %s241
      %s244 = sphi 0, %s243
      %s258 = sphi 0, %s244
      %s262 = sphi 0, %s262
      %s264 = sphi 0, %s262
      %s265 = sphi 0, %s264
      %s279 = sphi 0, %s265
      %s283 = sphi 0, %s283
      %s285 = sphi 0, %s283
      %s286 = sphi 0, %s285
      %s300 = sphi 0, %s286
      %s304 = sphi 0, %s304
      %s306 = sphi 0, %s304
      %s307 = sphi 0, %s306
      %s321 = sphi 0, %s307
      %s325 = sphi 0, %s325
      %s327 = sphi 0, %s325
      %s328 = sphi 0, %s327
      %s342 = sphi 0, %s328
      %s346 = sphi 0, %s346
      %s348 = sphi 0, %s346
      %s349 = sphi 0, %s348
      %s363 = sphi 0, %s349
      %s367 = sphi 0, %s367
      %s369 = sphi 0, %s367
      %s370 = sphi 0, %s369
      %s384 = sphi 0, %s370
      %s388 = sphi 0, %s388
      %s390 = sphi 0, %s388
      %s391 = sphi 0, %s390
      %s405 = sphi 0, %s391
      %s409 = sphi 0, %s409
      %s411 = sphi 0, %s409
      %s412 = sphi 0, %s411
      %s426 = sphi 0, %s412
      %s430 = sphi 0, %s430
      %s432 = sphi 0, %s430
      %s433 = sphi 0, %s432
      %s447 = sphi 0, %s433
      %s451 = sphi 0, %s451
      %s453 = sphi 0, %s451
      %s454 = sphi 0, %s453
      %s468 = sphi 0, %s454
      %s472 = sphi 0, %s472
      %s474 = sphi 0, %s472
      %s475 = sphi 0, %s474
      %s489 = sphi 0, %s475
      %s493 = sphi 0, %s493
      %s495 = sphi 0, %s493
      %s496 = sphi 0, %s495
      %s510 = sphi 0, %s496
      %s516 = sphi 0, %s518
      %s519 = sphi 0, %s516
      %s520 = sphi 0, %s519
      %s536 = sphi 0, %s520
    $region4: #{tpu_custom_call.1} parent=1 // loop_header_branch
      %37 = sbr.rel (%p35) target = $region8
    $region5: #{tpu_custom_call.1} parent=1 // loop_body
      %s39 = ssub.s32 %s34, 1
      %s40 = ssub.s32 %s34, 2
      %s41 = sadd.s32 %s34, 1
      %s42 = ssub.s32 %s34, %s41
      %p43 = scmp.eq.s32.totalorder %s42, 0
      %s45 = sadd.s32 %s44, 1
      %s46 = scalar_select %p43, %s44, %s45
      %p49 = pneg %p43
      %p50 = scmp.eq.s32.totalorder %s34, 1
      %p51 = por %p49, %p50
      %p52 = scmp.ne.s32.totalorder %s44, %s47
      %p53 = scmp.eq.s32.totalorder %s34, 0
      %p54 = por %p52, %p53
      %p55 = scmp.ne.s32.totalorder %s44, %s47
      %p56 = scmp.eq.s32.totalorder %s39, 1
      %p57 = por %p55, %p56
      %p58 = scmp.ne.s32.totalorder %s47, %s48
      %p59 = scmp.eq.s32.totalorder %s39, 0
      %p60 = por %p58, %p59
      %p61 = scmp.ne.s32.totalorder %s47, %s48
      %p62 = scmp.eq.s32.totalorder %s40, 1
      %p63 = por %p61, %p62
      %p65 = scmp.ne.s32.totalorder %s48, %s64
      %p66 = scmp.eq.s32.totalorder %s40, 0
      %p67 = por %p65, %p66
      %s68 = ssub.s32 %s34, %s41
      %p69 = scmp.eq.s32.totalorder %s68, 0
      %s71 = sadd.s32 %s70, 1
      %s72 = scalar_select %p69, %s70, %s71
      %p75 = pneg %p69
      %p76 = scmp.eq.s32.totalorder %s34, 1
      %p77 = por %p75, %p76
      %p78 = scmp.ne.s32.totalorder %s70, %s73
      %p79 = scmp.eq.s32.totalorder %s34, 0
      %p80 = por %p78, %p79
      %p81 = scmp.ne.s32.totalorder %s70, %s73
      %p82 = scmp.eq.s32.totalorder %s39, 1
      %p83 = por %p81, %p82
      %p84 = scmp.ne.s32.totalorder %s73, %s74
      %p85 = scmp.eq.s32.totalorder %s39, 0
      %p86 = por %p84, %p85
      %p87 = scmp.ne.s32.totalorder %s73, %s74
      %p88 = scmp.eq.s32.totalorder %s40, 1
      %p89 = por %p87, %p88
      %p91 = scmp.ne.s32.totalorder %s74, %s90
      %p92 = scmp.eq.s32.totalorder %s40, 0
      %p93 = por %p91, %p92
      %s95 = sadd.s32 %s94, 1
      %p98 = scmp.eq.s32.totalorder %s34, 1
      %p99 = scmp.ne.s32.totalorder %s94, %s96
      %p100 = scmp.eq.s32.totalorder %s34, 0
      %p101 = por %p99, %p100
      %p102 = scmp.ne.s32.totalorder %s94, %s96
      %p103 = scmp.eq.s32.totalorder %s39, 1
      %p104 = por %p102, %p103
      %p105 = scmp.ne.s32.totalorder %s96, %s97
      %p106 = scmp.eq.s32.totalorder %s39, 0
      %p107 = por %p105, %p106
      %p108 = scmp.ne.s32.totalorder %s96, %s97
      %p109 = scmp.eq.s32.totalorder %s40, 1
      %p110 = por %p108, %p109
      %p112 = scmp.ne.s32.totalorder %s97, %s111
      %p113 = scmp.eq.s32.totalorder %s40, 0
      %p114 = por %p112, %p113
      %s116 = sadd.s32 %s115, 1
      %p119 = scmp.eq.s32.totalorder %s34, 1
      %p120 = scmp.ne.s32.totalorder %s115, %s117
      %p121 = scmp.eq.s32.totalorder %s34, 0
      %p122 = por %p120, %p121
      %p123 = scmp.ne.s32.totalorder %s115, %s117
      %p124 = scmp.eq.s32.totalorder %s39, 1
      %p125 = por %p123, %p124
      %p126 = scmp.ne.s32.totalorder %s117, %s118
      %p127 = scmp.eq.s32.totalorder %s39, 0
      %p128 = por %p126, %p127
      %p129 = scmp.ne.s32.totalorder %s117, %s118
      %p130 = scmp.eq.s32.totalorder %s40, 1
      %p131 = por %p129, %p130
      %p133 = scmp.ne.s32.totalorder %s118, %s132
      %p134 = scmp.eq.s32.totalorder %s40, 0
      %p135 = por %p133, %p134
      %s137 = sadd.s32 %s136, 1
      %p140 = scmp.eq.s32.totalorder %s34, 1
      %p141 = scmp.ne.s32.totalorder %s136, %s138
      %p142 = scmp.eq.s32.totalorder %s34, 0
      %p143 = por %p141, %p142
      %p144 = scmp.ne.s32.totalorder %s136, %s138
      %p145 = scmp.eq.s32.totalorder %s39, 1
      %p146 = por %p144, %p145
      %p147 = scmp.ne.s32.totalorder %s138, %s139
      %p148 = scmp.eq.s32.totalorder %s39, 0
      %p149 = por %p147, %p148
      %p150 = scmp.ne.s32.totalorder %s138, %s139
      %p151 = scmp.eq.s32.totalorder %s40, 1
      %p152 = por %p150, %p151
      %p154 = scmp.ne.s32.totalorder %s139, %s153
      %p155 = scmp.eq.s32.totalorder %s40, 0
      %p156 = por %p154, %p155
      %s158 = sadd.s32 %s157, 1
      %p161 = scmp.eq.s32.totalorder %s34, 1
      %p162 = scmp.ne.s32.totalorder %s157, %s159
      %p163 = scmp.eq.s32.totalorder %s34, 0
      %p164 = por %p162, %p163
      %p165 = scmp.ne.s32.totalorder %s157, %s159
      %p166 = scmp.eq.s32.totalorder %s39, 1
      %p167 = por %p165, %p166
      %p168 = scmp.ne.s32.totalorder %s159, %s160
      %p169 = scmp.eq.s32.totalorder %s39, 0
      %p170 = por %p168, %p169
      %p171 = scmp.ne.s32.totalorder %s159, %s160
      %p172 = scmp.eq.s32.totalorder %s40, 1
      %p173 = por %p171, %p172
      %p175 = scmp.ne.s32.totalorder %s160, %s174
      %p176 = scmp.eq.s32.totalorder %s40, 0
      %p177 = por %p175, %p176
      %s179 = sadd.s32 %s178, 1
      %p182 = scmp.eq.s32.totalorder %s34, 1
      %p183 = scmp.ne.s32.totalorder %s178, %s180
      %p184 = scmp.eq.s32.totalorder %s34, 0
      %p185 = por %p183, %p184
      %p186 = scmp.ne.s32.totalorder %s178, %s180
      %p187 = scmp.eq.s32.totalorder %s39, 1
      %p188 = por %p186, %p187
      %p189 = scmp.ne.s32.totalorder %s180, %s181
      %p190 = scmp.eq.s32.totalorder %s39, 0
      %p191 = por %p189, %p190
      %p192 = scmp.ne.s32.totalorder %s180, %s181
      %p193 = scmp.eq.s32.totalorder %s40, 1
      %p194 = por %p192, %p193
      %p196 = scmp.ne.s32.totalorder %s181, %s195
      %p197 = scmp.eq.s32.totalorder %s40, 0
      %p198 = por %p196, %p197
      %s200 = sadd.s32 %s199, 1
      %p203 = scmp.eq.s32.totalorder %s34, 1
      %p204 = scmp.ne.s32.totalorder %s199, %s201
      %p205 = scmp.eq.s32.totalorder %s34, 0
      %p206 = por %p204, %p205
      %p207 = scmp.ne.s32.totalorder %s199, %s201
      %p208 = scmp.eq.s32.totalorder %s39, 1
      %p209 = por %p207, %p208
      %p210 = scmp.ne.s32.totalorder %s201, %s202
      %p211 = scmp.eq.s32.totalorder %s39, 0
      %p212 = por %p210, %p211
      %p213 = scmp.ne.s32.totalorder %s201, %s202
      %p214 = scmp.eq.s32.totalorder %s40, 1
      %p215 = por %p213, %p214
      %p217 = scmp.ne.s32.totalorder %s202, %s216
      %p218 = scmp.eq.s32.totalorder %s40, 0
      %p219 = por %p217, %p218
      %s221 = sadd.s32 %s220, 1
      %p224 = scmp.eq.s32.totalorder %s34, 1
      %p225 = scmp.ne.s32.totalorder %s220, %s222
      %p226 = scmp.eq.s32.totalorder %s34, 0
      %p227 = por %p225, %p226
      %p228 = scmp.ne.s32.totalorder %s220, %s222
      %p229 = scmp.eq.s32.totalorder %s39, 1
      %p230 = por %p228, %p229
      %p231 = scmp.ne.s32.totalorder %s222, %s223
      %p232 = scmp.eq.s32.totalorder %s39, 0
      %p233 = por %p231, %p232
      %p234 = scmp.ne.s32.totalorder %s222, %s223
      %p235 = scmp.eq.s32.totalorder %s40, 1
      %p236 = por %p234, %p235
      %p238 = scmp.ne.s32.totalorder %s223, %s237
      %p239 = scmp.eq.s32.totalorder %s40, 0
      %p240 = por %p238, %p239
      %s242 = sadd.s32 %s241, 1
      %p245 = scmp.eq.s32.totalorder %s34, 1
      %p246 = scmp.ne.s32.totalorder %s241, %s243
      %p247 = scmp.eq.s32.totalorder %s34, 0
      %p248 = por %p246, %p247
      %p249 = scmp.ne.s32.totalorder %s241, %s243
      %p250 = scmp.eq.s32.totalorder %s39, 1
      %p251 = por %p249, %p250
      %p252 = scmp.ne.s32.totalorder %s243, %s244
      %p253 = scmp.eq.s32.totalorder %s39, 0
      %p254 = por %p252, %p253
      %p255 = scmp.ne.s32.totalorder %s243, %s244
      %p256 = scmp.eq.s32.totalorder %s40, 1
      %p257 = por %p255, %p256
      %p259 = scmp.ne.s32.totalorder %s244, %s258
      %p260 = scmp.eq.s32.totalorder %s40, 0
      %p261 = por %p259, %p260
      %s263 = sadd.s32 %s262, 1
      %p266 = scmp.eq.s32.totalorder %s34, 1
      %p267 = scmp.ne.s32.totalorder %s262, %s264
      %p268 = scmp.eq.s32.totalorder %s34, 0
      %p269 = por %p267, %p268
      %p270 = scmp.ne.s32.totalorder %s262, %s264
      %p271 = scmp.eq.s32.totalorder %s39, 1
      %p272 = por %p270, %p271
      %p273 = scmp.ne.s32.totalorder %s264, %s265
      %p274 = scmp.eq.s32.totalorder %s39, 0
      %p275 = por %p273, %p274
      %p276 = scmp.ne.s32.totalorder %s264, %s265
      %p277 = scmp.eq.s32.totalorder %s40, 1
      %p278 = por %p276, %p277
      %p280 = scmp.ne.s32.totalorder %s265, %s279
      %p281 = scmp.eq.s32.totalorder %s40, 0
      %p282 = por %p280, %p281
      %s284 = sadd.s32 %s283, 1
      %p287 = scmp.eq.s32.totalorder %s34, 1
      %p288 = scmp.ne.s32.totalorder %s283, %s285
      %p289 = scmp.eq.s32.totalorder %s34, 0
      %p290 = por %p288, %p289
      %p291 = scmp.ne.s32.totalorder %s283, %s285
      %p292 = scmp.eq.s32.totalorder %s39, 1
      %p293 = por %p291, %p292
      %p294 = scmp.ne.s32.totalorder %s285, %s286
      %p295 = scmp.eq.s32.totalorder %s39, 0
      %p296 = por %p294, %p295
      %p297 = scmp.ne.s32.totalorder %s285, %s286
      %p298 = scmp.eq.s32.totalorder %s40, 1
      %p299 = por %p297, %p298
      %p301 = scmp.ne.s32.totalorder %s286, %s300
      %p302 = scmp.eq.s32.totalorder %s40, 0
      %p303 = por %p301, %p302
      %s305 = sadd.s32 %s304, 1
      %p308 = scmp.eq.s32.totalorder %s34, 1
      %p309 = scmp.ne.s32.totalorder %s304, %s306
      %p310 = scmp.eq.s32.totalorder %s34, 0
      %p311 = por %p309, %p310
      %p312 = scmp.ne.s32.totalorder %s304, %s306
      %p313 = scmp.eq.s32.totalorder %s39, 1
      %p314 = por %p312, %p313
      %p315 = scmp.ne.s32.totalorder %s306, %s307
      %p316 = scmp.eq.s32.totalorder %s39, 0
      %p317 = por %p315, %p316
      %p318 = scmp.ne.s32.totalorder %s306, %s307
      %p319 = scmp.eq.s32.totalorder %s40, 1
      %p320 = por %p318, %p319
      %p322 = scmp.ne.s32.totalorder %s307, %s321
      %p323 = scmp.eq.s32.totalorder %s40, 0
      %p324 = por %p322, %p323
      %s326 = sadd.s32 %s325, 1
      %p329 = scmp.eq.s32.totalorder %s34, 1
      %p330 = scmp.ne.s32.totalorder %s325, %s327
      %p331 = scmp.eq.s32.totalorder %s34, 0
      %p332 = por %p330, %p331
      %p333 = scmp.ne.s32.totalorder %s325, %s327
      %p334 = scmp.eq.s32.totalorder %s39, 1
      %p335 = por %p333, %p334
      %p336 = scmp.ne.s32.totalorder %s327, %s328
      %p337 = scmp.eq.s32.totalorder %s39, 0
      %p338 = por %p336, %p337
      %p339 = scmp.ne.s32.totalorder %s327, %s328
      %p340 = scmp.eq.s32.totalorder %s40, 1
      %p341 = por %p339, %p340
      %p343 = scmp.ne.s32.totalorder %s328, %s342
      %p344 = scmp.eq.s32.totalorder %s40, 0
      %p345 = por %p343, %p344
      %s347 = sadd.s32 %s346, 1
      %p350 = scmp.eq.s32.totalorder %s34, 1
      %p351 = scmp.ne.s32.totalorder %s346, %s348
      %p352 = scmp.eq.s32.totalorder %s34, 0
      %p353 = por %p351, %p352
      %p354 = scmp.ne.s32.totalorder %s346, %s348
      %p355 = scmp.eq.s32.totalorder %s39, 1
      %p356 = por %p354, %p355
      %p357 = scmp.ne.s32.totalorder %s348, %s349
      %p358 = scmp.eq.s32.totalorder %s39, 0
      %p359 = por %p357, %p358
      %p360 = scmp.ne.s32.totalorder %s348, %s349
      %p361 = scmp.eq.s32.totalorder %s40, 1
      %p362 = por %p360, %p361
      %p364 = scmp.ne.s32.totalorder %s349, %s363
      %p365 = scmp.eq.s32.totalorder %s40, 0
      %p366 = por %p364, %p365
      %s368 = sadd.s32 %s367, 1
      %p371 = scmp.eq.s32.totalorder %s34, 1
      %p372 = scmp.ne.s32.totalorder %s367, %s369
      %p373 = scmp.eq.s32.totalorder %s34, 0
      %p374 = por %p372, %p373
      %p375 = scmp.ne.s32.totalorder %s367, %s369
      %p376 = scmp.eq.s32.totalorder %s39, 1
      %p377 = por %p375, %p376
      %p378 = scmp.ne.s32.totalorder %s369, %s370
      %p379 = scmp.eq.s32.totalorder %s39, 0
      %p380 = por %p378, %p379
      %p381 = scmp.ne.s32.totalorder %s369, %s370
      %p382 = scmp.eq.s32.totalorder %s40, 1
      %p383 = por %p381, %p382
      %p385 = scmp.ne.s32.totalorder %s370, %s384
      %p386 = scmp.eq.s32.totalorder %s40, 0
      %p387 = por %p385, %p386
      %s389 = sadd.s32 %s388, 1
      %p392 = scmp.eq.s32.totalorder %s34, 1
      %p393 = scmp.ne.s32.totalorder %s388, %s390
      %p394 = scmp.eq.s32.totalorder %s34, 0
      %p395 = por %p393, %p394
      %p396 = scmp.ne.s32.totalorder %s388, %s390
      %p397 = scmp.eq.s32.totalorder %s39, 1
      %p398 = por %p396, %p397
      %p399 = scmp.ne.s32.totalorder %s390, %s391
      %p400 = scmp.eq.s32.totalorder %s39, 0
      %p401 = por %p399, %p400
      %p402 = scmp.ne.s32.totalorder %s390, %s391
      %p403 = scmp.eq.s32.totalorder %s40, 1
      %p404 = por %p402, %p403
      %p406 = scmp.ne.s32.totalorder %s391, %s405
      %p407 = scmp.eq.s32.totalorder %s40, 0
      %p408 = por %p406, %p407
      %s410 = sadd.s32 %s409, 1
      %p413 = scmp.eq.s32.totalorder %s34, 1
      %p414 = scmp.ne.s32.totalorder %s409, %s411
      %p415 = scmp.eq.s32.totalorder %s34, 0
      %p416 = por %p414, %p415
      %p417 = scmp.ne.s32.totalorder %s409, %s411
      %p418 = scmp.eq.s32.totalorder %s39, 1
      %p419 = por %p417, %p418
      %p420 = scmp.ne.s32.totalorder %s411, %s412
      %p421 = scmp.eq.s32.totalorder %s39, 0
      %p422 = por %p420, %p421
      %p423 = scmp.ne.s32.totalorder %s411, %s412
      %p424 = scmp.eq.s32.totalorder %s40, 1
      %p425 = por %p423, %p424
      %p427 = scmp.ne.s32.totalorder %s412, %s426
      %p428 = scmp.eq.s32.totalorder %s40, 0
      %p429 = por %p427, %p428
      %s431 = sadd.s32 %s430, 1
      %p434 = scmp.eq.s32.totalorder %s34, 1
      %p435 = scmp.ne.s32.totalorder %s430, %s432
      %p436 = scmp.eq.s32.totalorder %s34, 0
      %p437 = por %p435, %p436
      %p438 = scmp.ne.s32.totalorder %s430, %s432
      %p439 = scmp.eq.s32.totalorder %s39, 1
      %p440 = por %p438, %p439
      %p441 = scmp.ne.s32.totalorder %s432, %s433
      %p442 = scmp.eq.s32.totalorder %s39, 0
      %p443 = por %p441, %p442
      %p444 = scmp.ne.s32.totalorder %s432, %s433
      %p445 = scmp.eq.s32.totalorder %s40, 1
      %p446 = por %p444, %p445
      %p448 = scmp.ne.s32.totalorder %s433, %s447
      %p449 = scmp.eq.s32.totalorder %s40, 0
      %p450 = por %p448, %p449
      %s452 = sadd.s32 %s451, 1
      %p455 = scmp.eq.s32.totalorder %s34, 1
      %p456 = scmp.ne.s32.totalorder %s451, %s453
      %p457 = scmp.eq.s32.totalorder %s34, 0
      %p458 = por %p456, %p457
      %p459 = scmp.ne.s32.totalorder %s451, %s453
      %p460 = scmp.eq.s32.totalorder %s39, 1
      %p461 = por %p459, %p460
      %p462 = scmp.ne.s32.totalorder %s453, %s454
      %p463 = scmp.eq.s32.totalorder %s39, 0
      %p464 = por %p462, %p463
      %p465 = scmp.ne.s32.totalorder %s453, %s454
      %p466 = scmp.eq.s32.totalorder %s40, 1
      %p467 = por %p465, %p466
      %p469 = scmp.ne.s32.totalorder %s454, %s468
      %p470 = scmp.eq.s32.totalorder %s40, 0
      %p471 = por %p469, %p470
      %s473 = sadd.s32 %s472, 1
      %p476 = scmp.eq.s32.totalorder %s34, 1
      %p477 = scmp.ne.s32.totalorder %s472, %s474
      %p478 = scmp.eq.s32.totalorder %s34, 0
      %p479 = por %p477, %p478
      %p480 = scmp.ne.s32.totalorder %s472, %s474
      %p481 = scmp.eq.s32.totalorder %s39, 1
      %p482 = por %p480, %p481
      %p483 = scmp.ne.s32.totalorder %s474, %s475
      %p484 = scmp.eq.s32.totalorder %s39, 0
      %p485 = por %p483, %p484
      %p486 = scmp.ne.s32.totalorder %s474, %s475
      %p487 = scmp.eq.s32.totalorder %s40, 1
      %p488 = por %p486, %p487
      %p490 = scmp.ne.s32.totalorder %s475, %s489
      %p491 = scmp.eq.s32.totalorder %s40, 0
      %p492 = por %p490, %p491
      %s494 = sadd.s32 %s493, 1
      %p497 = scmp.eq.s32.totalorder %s34, 1
      %p498 = scmp.ne.s32.totalorder %s493, %s495
      %p499 = scmp.eq.s32.totalorder %s34, 0
      %p500 = por %p498, %p499
      %p501 = scmp.ne.s32.totalorder %s493, %s495
      %p502 = scmp.eq.s32.totalorder %s39, 1
      %p503 = por %p501, %p502
      %p504 = scmp.ne.s32.totalorder %s495, %s496
      %p505 = scmp.eq.s32.totalorder %s39, 0
      %p506 = por %p504, %p505
      %p507 = scmp.ne.s32.totalorder %s495, %s496
      %p508 = scmp.eq.s32.totalorder %s40, 1
      %p509 = por %p507, %p508
      %p511 = scmp.ne.s32.totalorder %s496, %s510
      %p512 = scmp.eq.s32.totalorder %s40, 0
      %p513 = por %p511, %p512
      %s514 = ssub.s32 %s34, %s41
      %p515 = scmp.eq.s32.totalorder %s514, 0
      %s517 = sadd.s32 %s516, 1
      %s518 = scalar_select %p515, %s516, %s517
      %p521 = pneg %p515
      %p522 = scmp.eq.s32.totalorder %s34, 1
      %p523 = por %p521, %p522
      %p524 = scmp.ne.s32.totalorder %s516, %s519
      %p525 = scmp.eq.s32.totalorder %s34, 0
      %p526 = por %p524, %p525
      %p527 = scmp.ne.s32.totalorder %s516, %s519
      %p528 = scmp.eq.s32.totalorder %s39, 1
      %p529 = por %p527, %p528
      %p530 = scmp.ne.s32.totalorder %s519, %s520
      %p531 = scmp.eq.s32.totalorder %s39, 0
      %p532 = por %p530, %p531
      %p533 = scmp.ne.s32.totalorder %s519, %s520
      %p534 = scmp.eq.s32.totalorder %s40, 1
      %p535 = por %p533, %p534
      %p537 = scmp.ne.s32.totalorder %s520, %s536
      %p538 = scmp.eq.s32.totalorder %s40, 0
      %p539 = por %p537, %p538
      %p540 = scmp.le.s32.totalorder 1, %s34
      %p541 = scmp.lt.s32.totalorder %s34, 3
      %p542 = pnand %p540, %p541
      %p543 = pneg %p542
      // Predicated region
      $region9: #{tpu_custom_call.1} parent=5 // pred_check
        _
      $region10: #{tpu_custom_call.1} parent=5 // pred_check_branch
        %545 = sbr.rel (%p542) target = $region12
      $region11: #{tpu_custom_call.1} parent=5 // pred_region
        %s546 = ssub.s32 %s34, 1
        // Predicated region
        $region13: #{tpu_custom_call.1} parent=11 // pred_check
          %p547 = pneg %p107
        $region14: #{tpu_custom_call.1} parent=11 // pred_check_branch
          %549 = sbr.rel (%p547) target = $region16
        $region15: #{tpu_custom_call.1} parent=11 // pred_region
          _
        $region16: #{tpu_custom_call.1} parent=11 // pred_fallthru
          _
        // Predicated region
        $region17: #{tpu_custom_call.1} parent=11 // pred_check
          %p550 = pneg %p128
        $region18: #{tpu_custom_call.1} parent=11 // pred_check_branch
          %552 = sbr.rel (%p550) target = $region20
        $region19: #{tpu_custom_call.1} parent=11 // pred_region
          _
        $region20: #{tpu_custom_call.1} parent=11 // pred_fallthru
          _
        // Predicated region
        $region21: #{tpu_custom_call.1} parent=11 // pred_check
          %p553 = pneg %p149
        $region22: #{tpu_custom_call.1} parent=11 // pred_check_branch
          %555 = sbr.rel (%p553) target = $region24
        $region23: #{tpu_custom_call.1} parent=11 // pred_region
          %557 = vsyncadd [#allocation3], 0
          %s558 = sshll.u32 %s4, 4
          %s559 = int_to_ptr.hbm [resolvable:$true] %s558
          %s560 = sshll.u32 [#allocation2], 4
          %s561 = int_to_ptr.vmem [resolvable:$true] %s560
          %566 = dma.hbm_to_vmem [thread:$0]  %s559, 256, %s561, [#allocation3], 64, 64, 4
        $region24: #{tpu_custom_call.1} parent=11 // pred_fallthru
          _
        // Predicated region
        $region25: #{tpu_custom_call.1} parent=11 // pred_check
          %p567 = pneg %p170
        $region26: #{tpu_custom_call.1} parent=11 // pred_check_branch
          %569 = sbr.rel (%p567) target = $region28
        $region27: #{tpu_custom_call.1} parent=11 // pred_region
          _
        $region28: #{tpu_custom_call.1} parent=11 // pred_fallthru
          _
        // Predicated region
        $region29: #{tpu_custom_call.1} parent=11 // pred_check
          %p570 = pneg %p191
        $region30: #{tpu_custom_call.1} parent=11 // pred_check_branch
          %572 = sbr.rel (%p570) target = $region32
        $region31: #{tpu_custom_call.1} parent=11 // pred_region
          %574 = vsyncadd [#allocation6], 0
          %s575 = sshll.u32 %s6, 4
          %s576 = int_to_ptr.hbm [resolvable:$true] %s575
          %s577 = sshll.u32 [#allocation5], 4
          %s578 = int_to_ptr.vmem [resolvable:$true] %s577
          %583 = dma.hbm_to_vmem [thread:$0]  %s576, 256, %s578, [#allocation6], 64, 64, 4
        $region32: #{tpu_custom_call.1} parent=11 // pred_fallthru
          _
        // Predicated region
        $region33: #{tpu_custom_call.1} parent=11 // pred_check
          %p584 = pneg %p212
        $region34: #{tpu_custom_call.1} parent=11 // pred_check_branch
          %586 = sbr.rel (%p584) target = $region36
        $region35: #{tpu_custom_call.1} parent=11 // pred_region
          _
        $region36: #{tpu_custom_call.1} parent=11 // pred_fallthru
          _
        // Predicated region
        $region37: #{tpu_custom_call.1} parent=11 // pred_check
          %p587 = pneg %p233
        $region38: #{tpu_custom_call.1} parent=11 // pred_check_branch
          %589 = sbr.rel (%p587) target = $region40
        $region39: #{tpu_custom_call.1} parent=11 // pred_region
          %591 = vsyncadd [#allocation6], 0
          %s592 = sshll.u32 %s8, 4
          %s593 = int_to_ptr.hbm [resolvable:$true] %s592
          %s594 = sshll.u32 [#allocation7], 4
          %s595 = int_to_ptr.vmem [resolvable:$true] %s594
          %600 = dma.hbm_to_vmem [thread:$0]  %s593, 256, %s595, [#allocation6], 64, 64, 4
        $region40: #{tpu_custom_call.1} parent=11 // pred_fallthru
          _
        // Predicated region
        $region41: #{tpu_custom_call.1} parent=11 // pred_check
          %p601 = pneg %p254
        $region42: #{tpu_custom_call.1} parent=11 // pred_check_branch
          %603 = sbr.rel (%p601) target = $region44
        $region43: #{tpu_custom_call.1} parent=11 // pred_region
          _
        $region44: #{tpu_custom_call.1} parent=11 // pred_fallthru
          _
        // Predicated region
        $region45: #{tpu_custom_call.1} parent=11 // pred_check
          %p604 = pneg %p275
        $region46: #{tpu_custom_call.1} parent=11 // pred_check_branch
          %606 = sbr.rel (%p604) target = $region48
        $region47: #{tpu_custom_call.1} parent=11 // pred_region
          %608 = vsyncadd [#allocation9], 0
          %s609 = sshll.u32 %s10, 4
          %s610 = int_to_ptr.hbm [resolvable:$true] %s609
          %s611 = sshll.u32 [#allocation8], 4
          %s612 = int_to_ptr.vmem [resolvable:$true] %s611
          %617 = dma.hbm_to_vmem [thread:$0]  %s610, 256, %s612, [#allocation9], 64, 64, 4
        $region48: #{tpu_custom_call.1} parent=11 // pred_fallthru
          _
        // Predicated region
        $region49: #{tpu_custom_call.1} parent=11 // pred_check
          %p618 = pneg %p296
        $region50: #{tpu_custom_call.1} parent=11 // pred_check_branch
          %620 = sbr.rel (%p618) target = $region52
        $region51: #{tpu_custom_call.1} parent=11 // pred_region
          _
        $region52: #{tpu_custom_call.1} parent=11 // pred_fallthru
          _
        // Predicated region
        $region53: #{tpu_custom_call.1} parent=11 // pred_check
          %p621 = pneg %p317
        $region54: #{tpu_custom_call.1} parent=11 // pred_check_branch
          %623 = sbr.rel (%p621) target = $region56
        $region55: #{tpu_custom_call.1} parent=11 // pred_region
          %625 = vsyncadd [#allocation9], 0
          %s626 = sshll.u32 %s12, 4
          %s627 = int_to_ptr.hbm [resolvable:$true] %s626
          %s628 = sshll.u32 [#allocation10], 4
          %s629 = int_to_ptr.vmem [resolvable:$true] %s628
          %634 = dma.hbm_to_vmem [thread:$0]  %s627, 256, %s629, [#allocation9], 64, 64, 4
        $region56: #{tpu_custom_call.1} parent=11 // pred_fallthru
          _
        // Predicated region
        $region57: #{tpu_custom_call.1} parent=11 // pred_check
          %p635 = pneg %p338
        $region58: #{tpu_custom_call.1} parent=11 // pred_check_branch
          %637 = sbr.rel (%p635) target = $region60
        $region59: #{tpu_custom_call.1} parent=11 // pred_region
          _
        $region60: #{tpu_custom_call.1} parent=11 // pred_fallthru
          _
        // Predicated region
        $region61: #{tpu_custom_call.1} parent=11 // pred_check
          %p638 = pneg %p359
        $region62: #{tpu_custom_call.1} parent=11 // pred_check_branch
          %640 = sbr.rel (%p638) target = $region64
        $region63: #{tpu_custom_call.1} parent=11 // pred_region
          _
        $region64: #{tpu_custom_call.1} parent=11 // pred_fallthru
          _
        // Predicated region
        $region65: #{tpu_custom_call.1} parent=11 // pred_check
          %p641 = pneg %p380
        $region66: #{tpu_custom_call.1} parent=11 // pred_check_branch
          %643 = sbr.rel (%p641) target = $region68
        $region67: #{tpu_custom_call.1} parent=11 // pred_region
          _
        $region68: #{tpu_custom_call.1} parent=11 // pred_fallthru
          _
        // Predicated region
        $region69: #{tpu_custom_call.1} parent=11 // pred_check
          %p644 = pneg %p401
        $region70: #{tpu_custom_call.1} parent=11 // pred_check_branch
          %646 = sbr.rel (%p644) target = $region72
        $region71: #{tpu_custom_call.1} parent=11 // pred_region
          _
        $region72: #{tpu_custom_call.1} parent=11 // pred_fallthru
          _
        // Predicated region
        $region73: #{tpu_custom_call.1} parent=11 // pred_check
          %p647 = pneg %p422
        $region74: #{tpu_custom_call.1} parent=11 // pred_check_branch
          %649 = sbr.rel (%p647) target = $region76
        $region75: #{tpu_custom_call.1} parent=11 // pred_region
          _
        $region76: #{tpu_custom_call.1} parent=11 // pred_fallthru
          _
        // Predicated region
        $region77: #{tpu_custom_call.1} parent=11 // pred_check
          %p650 = pneg %p443
        $region78: #{tpu_custom_call.1} parent=11 // pred_check_branch
          %652 = sbr.rel (%p650) target = $region80
        $region79: #{tpu_custom_call.1} parent=11 // pred_region
          _
        $region80: #{tpu_custom_call.1} parent=11 // pred_fallthru
          _
        // Predicated region
        $region81: #{tpu_custom_call.1} parent=11 // pred_check
          %p653 = pneg %p464
        $region82: #{tpu_custom_call.1} parent=11 // pred_check_branch
          %655 = sbr.rel (%p653) target = $region84
        $region83: #{tpu_custom_call.1} parent=11 // pred_region
          _
        $region84: #{tpu_custom_call.1} parent=11 // pred_fallthru
          _
        // Predicated region
        $region85: #{tpu_custom_call.1} parent=11 // pred_check
          %p656 = pneg %p485
        $region86: #{tpu_custom_call.1} parent=11 // pred_check_branch
          %658 = sbr.rel (%p656) target = $region88
        $region87: #{tpu_custom_call.1} parent=11 // pred_region
          _
        $region88: #{tpu_custom_call.1} parent=11 // pred_fallthru
          _
        // Predicated region
        $region89: #{tpu_custom_call.1} parent=11 // pred_check
          %p659 = pneg %p506
        $region90: #{tpu_custom_call.1} parent=11 // pred_check_branch
          %661 = sbr.rel (%p659) target = $region92
        $region91: #{tpu_custom_call.1} parent=11 // pred_region
          _
        $region92: #{tpu_custom_call.1} parent=11 // pred_fallthru
          _
      $region12: #{tpu_custom_call.1} parent=5 // pred_fallthru
        _
      %p662 = scmp.lt.s32.totalorder %s34, 2
      // Predicated region
      $region93: #{tpu_custom_call.1} parent=5 // pred_check
        %p663 = pneg %p662
      $region94: #{tpu_custom_call.1} parent=5 // pred_check_branch
        %665 = sbr.rel (%p663) target = $region96
      $region95: #{tpu_custom_call.1} parent=5 // pred_region
        // Predicated region
        $region97: #{tpu_custom_call.1} parent=95 // pred_check
          %p666 = pneg %p54
        $region98: #{tpu_custom_call.1} parent=95 // pred_check_branch
          %668 = sbr.rel (%p666) target = $region100
        $region99: #{tpu_custom_call.1} parent=95 // pred_region
          %p669 = scmp.lt.s32.totalorder %s34, 1
          %s670 = scalar_select %p669, %s34, 1
          %s671 = smul.addr %s670, 8
          %s672 = scalar_lea.vmem %s0, %s671
        $region100: #{tpu_custom_call.1} parent=95 // pred_fallthru
          _
        // Predicated region
        $region101: #{tpu_custom_call.1} parent=95 // pred_check
          %p673 = pneg %p80
        $region102: #{tpu_custom_call.1} parent=95 // pred_check_branch
          %675 = sbr.rel (%p673) target = $region104
        $region103: #{tpu_custom_call.1} parent=95 // pred_region
          %p676 = scmp.lt.s32.totalorder %s34, 1
          %s677 = scalar_select %p676, %s34, 1
          %s678 = smul.addr %s677, 8
          %s679 = scalar_lea.vmem %s1, %s678
        $region104: #{tpu_custom_call.1} parent=95 // pred_fallthru
          _
      $region96: #{tpu_custom_call.1} parent=5 // pred_fallthru
        _
      %p680 = scmp.le.s32.totalorder 1, %s34
      %p681 = scmp.lt.s32.totalorder %s34, 3
      %p682 = pnand %p680, %p681
      %p683 = pneg %p682
      // Predicated region
      $region105: #{tpu_custom_call.1} parent=5 // pred_check
        _
      $region106: #{tpu_custom_call.1} parent=5 // pred_check_branch
        %685 = sbr.rel (%p682) target = $region108
      $region107: #{tpu_custom_call.1} parent=5 // pred_region
        %s686 = ssub.s32 %s34, 1
        // Predicated region
        $region109: #{tpu_custom_call.1} parent=107 // pred_check
          %p687 = pneg %p149
        $region110: #{tpu_custom_call.1} parent=107 // pred_check_branch
          %689 = sbr.rel (%p687) target = $region112
        $region111: #{tpu_custom_call.1} parent=107 // pred_region
          %691 = dma.done [#allocation3], 256
        $region112: #{tpu_custom_call.1} parent=107 // pred_fallthru
          _
        // Predicated region
        $region113: #{tpu_custom_call.1} parent=107 // pred_check
          %p692 = pneg %p191
        $region114: #{tpu_custom_call.1} parent=107 // pred_check_branch
          %694 = sbr.rel (%p692) target = $region116
        $region115: #{tpu_custom_call.1} parent=107 // pred_region
          %696 = dma.done [#allocation6], 256
        $region116: #{tpu_custom_call.1} parent=107 // pred_fallthru
          _
        // Predicated region
        $region117: #{tpu_custom_call.1} parent=107 // pred_check
          %p697 = pneg %p233
        $region118: #{tpu_custom_call.1} parent=107 // pred_check_branch
          %699 = sbr.rel (%p697) target = $region120
        $region119: #{tpu_custom_call.1} parent=107 // pred_region
          %701 = dma.done [#allocation6], 256
        $region120: #{tpu_custom_call.1} parent=107 // pred_fallthru
          _
        // Predicated region
        $region121: #{tpu_custom_call.1} parent=107 // pred_check
          %p702 = pneg %p275
        $region122: #{tpu_custom_call.1} parent=107 // pred_check_branch
          %704 = sbr.rel (%p702) target = $region124
        $region123: #{tpu_custom_call.1} parent=107 // pred_region
          %706 = dma.done [#allocation9], 256
        $region124: #{tpu_custom_call.1} parent=107 // pred_fallthru
          _
        // Predicated region
        $region125: #{tpu_custom_call.1} parent=107 // pred_check
          %p707 = pneg %p317
        $region126: #{tpu_custom_call.1} parent=107 // pred_check_branch
          %709 = sbr.rel (%p707) target = $region128
        $region127: #{tpu_custom_call.1} parent=107 // pred_region
          %711 = dma.done [#allocation9], 256
        $region128: #{tpu_custom_call.1} parent=107 // pred_fallthru
          _
        %p712 = scmp.lt.s32.totalorder %s39, 1
        %s713 = scalar_select %p712, %s39, 1
        %s714 = smul.addr %s713, 8
        %s715 = scalar_lea.vmem %s0, %s714
        %p716 = pneg %p60
        %p717 = pneg %p57
        %p718 = scmp.lt.s32.totalorder %s39, 1
        %s719 = scalar_select %p718, %s39, 1
        %s720 = smul.addr %s719, 8
        %s721 = scalar_lea.vmem %s1, %s720
        %p722 = pneg %p86
        %p723 = pneg %p83
        %p724 = pneg %p107
        %p725 = pneg %p104
        %p726 = pneg %p128
        %p727 = pneg %p125
        %p728 = pneg %p149
        %p729 = pneg %p146
        %p730 = pneg %p170
        %p731 = pneg %p167
        %p732 = pneg %p191
        %p733 = pneg %p188
        %p734 = pneg %p212
        %p735 = pneg %p209
        %p736 = pneg %p233
        %p737 = pneg %p230
        %p738 = pneg %p254
        %p739 = pneg %p251
        %p740 = pneg %p275
        %p741 = pneg %p272
        %p742 = pneg %p296
        %p743 = pneg %p293
        %p744 = pneg %p317
        %p745 = pneg %p314
        %p746 = pneg %p338
        %p747 = pneg %p335
        %p748 = pneg %p359
        %p749 = pneg %p356
        %p750 = pneg %p380
        %p751 = pneg %p377
        %p752 = pneg %p401
        %p753 = pneg %p398
        %p754 = pneg %p422
        %p755 = pneg %p419
        %p756 = pneg %p443
        %p757 = pneg %p440
        %p758 = pneg %p464
        %p759 = pneg %p461
        %p760 = pneg %p485
        %p761 = pneg %p482
        %p762 = pneg %p506
        %p763 = pneg %p503
        %p764 = pneg %p532
        %p765 = pneg %p529
        %s766 = sand.u32 %s519, 1
        %s767 = scalar_lea.sflag [#allocation4], %s766
        %s768 = sand.u32 %s519, 1
        %s769 = smul.addr %s768, 8
        %s770 = scalar_lea.vmem [#allocation11], %s769
        %p771 = scmp.lt.s32.totalorder %s39, 1
        %s772 = scalar_select %p771, %s39, 1
        %s773 = smul.addr %s772, 8
        %s774 = scalar_lea.vmem %s0, %s773
        %p775 = scmp.lt.s32.totalorder %s39, 1
        %s776 = scalar_select %p775, %s39, 1
        %s777 = smul.addr %s776, 8
        %s778 = scalar_lea.vmem %s1, %s777
        %v780 = vld [vmem:[%s2] sm:$0xf]
        %v781 = vld [vmem:[%s2 + $0x4] sm:$0xf]
        %v782 = vld [vmem:[%s2 + $0x8] sm:$0xf]
        %v783 = vld [vmem:[%s2 + $0xc] sm:$0xf]
        %v784 = vld [vmem:[%s3] sm:$0x1]
        %v785 = vld [vmem:[#allocation2] sm:$0xf]
        %v786 = vld [vmem:[#allocation2 + $0x4] sm:$0xf]
        %v787 = vld [vmem:[#allocation2 + $0x8] sm:$0xf]
        %v788 = vld [vmem:[#allocation2 + $0xc] sm:$0xf]
        %v789 = vld [vmem:[%s5] sm:$0x1]
        %v790 = vld [vmem:[#allocation5] sm:$0xf]
        %v791 = vld [vmem:[#allocation5 + $0x4] sm:$0xf]
        %v792 = vld [vmem:[#allocation5 + $0x8] sm:$0xf]
        %v793 = vld [vmem:[#allocation5 + $0xc] sm:$0xf]
        %v794 = vld [vmem:[%s7] sm:$0x1]
        %v795 = vld [vmem:[#allocation7] sm:$0xf]
        %v796 = vld [vmem:[#allocation7 + $0x4] sm:$0xf]
        %v797 = vld [vmem:[#allocation7 + $0x8] sm:$0xf]
        %v798 = vld [vmem:[#allocation7 + $0xc] sm:$0xf]
        %v799 = vld [vmem:[%s9] sm:$0x1]
        %v800 = vld [vmem:[#allocation8] sm:$0xf]
        %v801 = vld [vmem:[#allocation8 + $0x4] sm:$0xf]
        %v802 = vld [vmem:[#allocation8 + $0x8] sm:$0xf]
        %v803 = vld [vmem:[#allocation8 + $0xc] sm:$0xf]
        %v804 = vld [vmem:[%s11] sm:$0x1]
        %v805 = vld [vmem:[#allocation10] sm:$0xf]
        %v806 = vld [vmem:[#allocation10 + $0x4] sm:$0xf]
        %v807 = vld [vmem:[#allocation10 + $0x8] sm:$0xf]
        %v808 = vld [vmem:[#allocation10 + $0xc] sm:$0xf]
        %v809 = vld [vmem:[%s13] sm:$0x1]
        %v810 = vld [vmem:[%s14] sm:$0xf]
        %v811 = vld [vmem:[%s14 + $0x4] sm:$0xf]
        %v812 = vld [vmem:[%s14 + $0x8] sm:$0xf]
        %v813 = vld [vmem:[%s14 + $0xc] sm:$0xf]
        %v814 = vld [vmem:[%s14 + $0x10] sm:$0xf]
        %v815 = vld [vmem:[%s14 + $0x14] sm:$0xf]
        %v816 = vld [vmem:[%s14 + $0x18] sm:$0xf]
        %v817 = vld [vmem:[%s14 + $0x1c] sm:$0xf]
        %v818 = vld [vmem:[%s15] sm:$0x1]
        %v819 = vld [vmem:[%s16] sm:$0x1]
        %v820 = vld [vmem:[%s17] sm:$0x1]
        %v821 = vld [vmem:[%s18] sm:$0x1]
        %v822 = vld [vmem:[%s19] sm:$0x1]
        %v823 = vld [vmem:[%s20] sm:$0x1]
        %v824 = vld [vmem:[%s21] sm:$0x1]
        %v825 = vld [vmem:[%s774] sm:$0xff]
        %v826 = vld [vmem:[%s778] sm:$0xff]
        %v827 = vpack.c.bf16 %v825, %v825
        %v829 = vperm.slane %v784, 0
        %v835 = vunpack.c.l.b16 %v780
        %v836 = vunpack.c.l.b16 %v781
        %v837 = vunpack.c.l.b16 %v782
        %v838 = vunpack.c.l.b16 %v783
        %v839 = vpack.c.b16 %v836, %v835
        %v840 = vpack.c.b16 %v838, %v837
        %vm843 = vcmask 261120
        %v845 = vsel %vm843, %v827, 0
        %847 = vmatpush.bf16.msra.mxu0 0
        %848 = vmatpush.bf16.msra.mxu0 0
        %849 = vmatpush.bf16.msra.mxu0 0
        %850 = vmatpush.bf16.msra.mxu0 0
        %851 = vmatpush.bf16.msra.mxu0 0
        %852 = vmatpush.bf16.msra.mxu0 0
        %853 = vmatpush.bf16.msra.mxu0 %v840
        %854 = vmatpush.bf16.msra.mxu0 %v839
        %855 = vmatmul.bf16.gmra.mxu0 %v845
        %v856 = vpop.f32.mrf.mxu0
        %v857 = vadd.f32 %v829, %v856
        %v858 = vpop.f32.mrf.mxu0
        %859 = vdwg.mxu0
        %861 = vrot.lane.b32.xlu0 %v857, 120
        %v862 = vpop.permute.xlu0 %861
        %864 = vrot.lane.b32.xlu0 %v857, 112
        %v865 = vpop.permute.xlu0 %864
        %867 = vrot.lane.b32.xlu0 %v857, 104
        %v868 = vpop.permute.xlu0 %867
        %v870 = vpack.c.bf16 %v857, %v857
        %v871 = vpack.c.bf16 %v862, %v862
        %v872 = vpack.c.bf16 %v865, %v865
        %v873 = vpack.c.bf16 %v868, %v868
        %v875 = vunpack.c.l.b16 %v870
        %v876 = vpack.c.b16 %v875, %v875
        %877 = vrot.lane.b32.xlu0 %v876, 96
        %v878 = vpop.permute.xlu0 %877
        %vm879 = vcmask 64512
        %v881 = vsel %vm879, %v870, 0
        %v884 = vsel %vm879, %v878, 0
        %886 = vmatpush.bf16.xpose.msra.mxu0 0
        %887 = vmatpush.bf16.xpose.msra.mxu0 0
        %888 = vmatpush.bf16.xpose.msra.mxu0 0
        %889 = vmatpush.bf16.xpose.msra.mxu0 0
        %890 = vmatpush.bf16.xpose.msra.mxu0 0
        %891 = vmatpush.bf16.xpose.msra.mxu0 0
        %892 = vmatpush.bf16.xpose.msra.mxu0 0
        %893 = vmatpush.bf16.xpose.msra.mxu0 %v884
        %894 = vmatmul.bf16.gmra.mxu0 %v881
        %v895 = vpop.f32.mrf.mxu0
        %v896 = vadd.f32 0.0, %v895
        %v897 = vpop.f32.mrf.mxu0
        %898 = vdwg.mxu0
        %v900 = vunpack.c.l.b16 %v871
        %v901 = vpack.c.b16 %v900, %v900
        %902 = vrot.lane.b32.xlu0 %v901, 96
        %v903 = vpop.permute.xlu0 %902
        %v905 = vsel %vm879, %v871, 0
        %v908 = vsel %vm879, %v903, 0
        %910 = vmatpush.bf16.xpose.msra.mxu0 0
        %911 = vmatpush.bf16.xpose.msra.mxu0 0
        %912 = vmatpush.bf16.xpose.msra.mxu0 0
        %913 = vmatpush.bf16.xpose.msra.mxu0 0
        %914 = vmatpush.bf16.xpose.msra.mxu0 0
        %915 = vmatpush.bf16.xpose.msra.mxu0 0
        %916 = vmatpush.bf16.xpose.msra.mxu0 0
        %917 = vmatpush.bf16.xpose.msra.mxu0 %v908
        %918 = vmatmul.bf16.gmra.mxu0 %v905
        %v919 = vpop.f32.mrf.mxu0
        %v920 = vadd.f32 0.0, %v919
        %v921 = vpop.f32.mrf.mxu0
        %922 = vdwg.mxu0
        %v924 = vunpack.c.l.b16 %v872
        %v925 = vpack.c.b16 %v924, %v924
        %926 = vrot.lane.b32.xlu0 %v925, 96
        %v927 = vpop.permute.xlu0 %926
        %v929 = vsel %vm879, %v872, 0
        %v932 = vsel %vm879, %v927, 0
        %934 = vmatpush.bf16.xpose.msra.mxu0 0
        %935 = vmatpush.bf16.xpose.msra.mxu0 0
        %936 = vmatpush.bf16.xpose.msra.mxu0 0
        %937 = vmatpush.bf16.xpose.msra.mxu0 0
        %938 = vmatpush.bf16.xpose.msra.mxu0 0
        %939 = vmatpush.bf16.xpose.msra.mxu0 0
        %940 = vmatpush.bf16.xpose.msra.mxu0 0
        %941 = vmatpush.bf16.xpose.msra.mxu0 %v932
        %942 = vmatmul.bf16.gmra.mxu0 %v929
        %v943 = vpop.f32.mrf.mxu0
        %v944 = vadd.f32 0.0, %v943
        %v945 = vpop.f32.mrf.mxu0
        %946 = vdwg.mxu0
        %v948 = vunpack.c.l.b16 %v873
        %v949 = vpack.c.b16 %v948, %v948
        %950 = vrot.lane.b32.xlu0 %v949, 96
        %v951 = vpop.permute.xlu0 %950
        %v953 = vsel %vm879, %v873, 0
        %v956 = vsel %vm879, %v951, 0
        %958 = vmatpush.bf16.xpose.msra.mxu0 0
        %959 = vmatpush.bf16.xpose.msra.mxu0 0
        %960 = vmatpush.bf16.xpose.msra.mxu0 0
        %961 = vmatpush.bf16.xpose.msra.mxu0 0
        %962 = vmatpush.bf16.xpose.msra.mxu0 0
        %963 = vmatpush.bf16.xpose.msra.mxu0 0
        %964 = vmatpush.bf16.xpose.msra.mxu0 0
        %965 = vmatpush.bf16.xpose.msra.mxu0 %v956
        %966 = vmatmul.bf16.gmra.mxu0 %v953
        %v967 = vpop.f32.mrf.mxu0
        %v968 = vadd.f32 0.0, %v967
        %v969 = vpop.f32.mrf.mxu0
        %970 = vdwg.mxu0
        %v971 = vsel %vm879, %v896, -inf
        %972 = vmax.xlane.f32.xlu0 %v971
        %v973 = vpop.xlane.xlu0 %972
        %v974 = vsel %vm879, %v920, -inf
        %975 = vmax.xlane.f32.xlu0 %v974
        %v976 = vpop.xlane.xlu0 %975
        %v977 = vsel %vm879, %v944, -inf
        %978 = vmax.xlane.f32.xlu0 %v977
        %v979 = vpop.xlane.xlu0 %978
        %v980 = vsel %vm879, %v968, -inf
        %981 = vmax.xlane.f32.xlu0 %v980
        %v982 = vpop.xlane.xlu0 %981
        %v983 = vsub.f32 %v896, %v973
        %v984 = vsub.f32 %v920, %v976
        %v985 = vsub.f32 %v944, %v979
        %v986 = vsub.f32 %v968, %v982
        %v987 = vmul.f32 %v983, 1.442695
        %v988 = vpow.pop %v987
        %v989 = vmul.f32 %v984, 1.442695
        %v990 = vpow.pop %v989
        %v991 = vmul.f32 %v985, 1.442695
        %v992 = vpow.pop %v991
        %v993 = vmul.f32 %v986, 1.442695
        %v994 = vpow.pop %v993
        %v995 = vsel %vm879, %v988, 0.0
        %996 = vadd.xlane.f32.xlu0 %v995
        %v997 = vpop.xlane.xlu0 %996
        %v998 = vsel %vm879, %v990, 0.0
        %999 = vadd.xlane.f32.xlu0 %v998
        %v1000 = vpop.xlane.xlu0 %999
        %v1001 = vsel %vm879, %v992, 0.0
        %1002 = vadd.xlane.f32.xlu0 %v1001
        %v1003 = vpop.xlane.xlu0 %1002
        %v1004 = vsel %vm879, %v994, 0.0
        %1005 = vadd.xlane.f32.xlu0 %v1004
        %v1006 = vpop.xlane.xlu0 %1005
        %v1007 = vrcp.pop %v997
        %v1008 = vrcp.pop %v1000
        %v1009 = vrcp.pop %v1003
        %v1010 = vrcp.pop %v1006
        %v1011 = vmul.f32 %v988, %v1007
        %v1012 = vmul.f32 %v990, %v1008
        %v1013 = vmul.f32 %v992, %v1009
        %v1014 = vmul.f32 %v994, %v1010
        %v1015 = vpack.c.bf16 %v1011, %v1011
        %v1016 = vpack.c.bf16 %v1012, %v1012
        %v1017 = vpack.c.bf16 %v1013, %v1013
        %v1018 = vpack.c.bf16 %v1014, %v1014
        %1019 = vrot.lane.b32.xlu0 %v876, 64
        %v1020 = vpop.permute.xlu0 %1019
        %v1022 = vsel %vm879, %v1015, 0
        %vm1024 = vcmask 1043456
        %v1026 = vsel %vm1024, %v1020, 0
        %1028 = vmatpush.bf16.msra.mxu0 0
        %1029 = vmatpush.bf16.msra.mxu0 0
        %1030 = vmatpush.bf16.msra.mxu0 0
        %1031 = vmatpush.bf16.msra.mxu0 0
        %1032 = vmatpush.bf16.msra.mxu0 0
        %1033 = vmatpush.bf16.msra.mxu0 0
        %1034 = vmatpush.bf16.msra.mxu0 0
        %1035 = vmatpush.bf16.msra.mxu0 %v1026
        %1036 = vmatmul.bf16.gmra.mxu0 %v1022
        %v1037 = vpop.f32.mrf.mxu0
        %v1038 = vadd.f32 0.0, %v1037
        %v1039 = vpop.f32.mrf.mxu0
        %1040 = vdwg.mxu0
        %1041 = vrot.lane.b32.xlu0 %v901, 64
        %v1042 = vpop.permute.xlu0 %1041
        %v1044 = vsel %vm879, %v1016, 0
        %v1047 = vsel %vm1024, %v1042, 0
        %1049 = vmatpush.bf16.msra.mxu0 0
        %1050 = vmatpush.bf16.msra.mxu0 0
        %1051 = vmatpush.bf16.msra.mxu0 0
        %1052 = vmatpush.bf16.msra.mxu0 0
        %1053 = vmatpush.bf16.msra.mxu0 0
        %1054 = vmatpush.bf16.msra.mxu0 0
        %1055 = vmatpush.bf16.msra.mxu0 0
        %1056 = vmatpush.bf16.msra.mxu0 %v1047
        %1057 = vmatmul.bf16.gmra.mxu0 %v1044
        %v1058 = vpop.f32.mrf.mxu0
        %v1059 = vadd.f32 0.0, %v1058
        %v1060 = vpop.f32.mrf.mxu0
        %1061 = vdwg.mxu0
        %1062 = vrot.lane.b32.xlu0 %v925, 64
        %v1063 = vpop.permute.xlu0 %1062
        %v1065 = vsel %vm879, %v1017, 0
        %v1068 = vsel %vm1024, %v1063, 0
        %1070 = vmatpush.bf16.msra.mxu0 0
        %1071 = vmatpush.bf16.msra.mxu0 0
        %1072 = vmatpush.bf16.msra.mxu0 0
        %1073 = vmatpush.bf16.msra.mxu0 0
        %1074 = vmatpush.bf16.msra.mxu0 0
        %1075 = vmatpush.bf16.msra.mxu0 0
        %1076 = vmatpush.bf16.msra.mxu0 0
        %1077 = vmatpush.bf16.msra.mxu0 %v1068
        %1078 = vmatmul.bf16.gmra.mxu0 %v1065
        %v1079 = vpop.f32.mrf.mxu0
        %v1080 = vadd.f32 0.0, %v1079
        %v1081 = vpop.f32.mrf.mxu0
        %1082 = vdwg.mxu0
        %1083 = vrot.lane.b32.xlu0 %v949, 64
        %v1084 = vpop.permute.xlu0 %1083
        %v1086 = vsel %vm879, %v1018, 0
        %v1089 = vsel %vm1024, %v1084, 0
        %1091 = vmatpush.bf16.msra.mxu0 0
        %1092 = vmatpush.bf16.msra.mxu0 0
        %1093 = vmatpush.bf16.msra.mxu0 0
        %1094 = vmatpush.bf16.msra.mxu0 0
        %1095 = vmatpush.bf16.msra.mxu0 0
        %1096 = vmatpush.bf16.msra.mxu0 0
        %1097 = vmatpush.bf16.msra.mxu0 0
        %1098 = vmatpush.bf16.msra.mxu0 %v1089
        %1099 = vmatmul.bf16.gmra.mxu0 %v1086
        %v1100 = vpop.f32.mrf.mxu0
        %v1101 = vadd.f32 0.0, %v1100
        %v1102 = vpop.f32.mrf.mxu0
        %1103 = vdwg.mxu0
        %v1104 = vpack.c.bf16 %v1038, %v1038
        %v1105 = vpack.c.bf16 %v1059, %v1059
        %v1106 = vpack.c.bf16 %v1080, %v1080
        %v1107 = vpack.c.bf16 %v1101, %v1101
        %v1109 = vsel %vm879, %v1104, 0
        %v1112 = vsel %vm1024, %v785, 0
        %1114 = vmatpush.bf16.msra.mxu0 0
        %1115 = vmatpush.bf16.msra.mxu0 0
        %1116 = vmatpush.bf16.msra.mxu0 0
        %1117 = vmatpush.bf16.msra.mxu0 0
        %1118 = vmatpush.bf16.msra.mxu0 0
        %1119 = vmatpush.bf16.msra.mxu0 0
        %1120 = vmatpush.bf16.msra.mxu0 0
        %1121 = vmatpush.bf16.msra.mxu0 %v1112
        %1122 = vmatmul.bf16.gmra.mxu0 %v1109
        %v1123 = vpop.f32.mrf.mxu0
        %v1124 = vadd.f32 0.0, %v1123
        %v1125 = vpop.f32.mrf.mxu0
        %1126 = vdwg.mxu0
        %v1128 = vsel %vm879, %v1105, 0
        %v1131 = vsel %vm1024, %v786, 0
        %1133 = vmatpush.bf16.msra.mxu0 0
        %1134 = vmatpush.bf16.msra.mxu0 0
        %1135 = vmatpush.bf16.msra.mxu0 0
        %1136 = vmatpush.bf16.msra.mxu0 0
        %1137 = vmatpush.bf16.msra.mxu0 0
        %1138 = vmatpush.bf16.msra.mxu0 0
        %1139 = vmatpush.bf16.msra.mxu0 0
        %1140 = vmatpush.bf16.msra.mxu0 %v1131
        %1141 = vmatmul.bf16.gmra.mxu0 %v1128
        %v1142 = vpop.f32.mrf.mxu0
        %v1143 = vadd.f32 0.0, %v1142
        %v1144 = vpop.f32.mrf.mxu0
        %1145 = vdwg.mxu0
        %v1147 = vsel %vm879, %v1106, 0
        %v1150 = vsel %vm1024, %v787, 0
        %1152 = vmatpush.bf16.msra.mxu0 0
        %1153 = vmatpush.bf16.msra.mxu0 0
        %1154 = vmatpush.bf16.msra.mxu0 0
        %1155 = vmatpush.bf16.msra.mxu0 0
        %1156 = vmatpush.bf16.msra.mxu0 0
        %1157 = vmatpush.bf16.msra.mxu0 0
        %1158 = vmatpush.bf16.msra.mxu0 0
        %1159 = vmatpush.bf16.msra.mxu0 %v1150
        %1160 = vmatmul.bf16.gmra.mxu0 %v1147
        %v1161 = vpop.f32.mrf.mxu0
        %v1162 = vadd.f32 0.0, %v1161
        %v1163 = vpop.f32.mrf.mxu0
        %1164 = vdwg.mxu0
        %v1166 = vsel %vm879, %v1107, 0
        %v1169 = vsel %vm1024, %v788, 0
        %1171 = vmatpush.bf16.msra.mxu0 0
        %1172 = vmatpush.bf16.msra.mxu0 0
        %1173 = vmatpush.bf16.msra.mxu0 0
        %1174 = vmatpush.bf16.msra.mxu0 0
        %1175 = vmatpush.bf16.msra.mxu0 0
        %1176 = vmatpush.bf16.msra.mxu0 0
        %1177 = vmatpush.bf16.msra.mxu0 0
        %1178 = vmatpush.bf16.msra.mxu0 %v1169
        %1179 = vmatmul.bf16.gmra.mxu0 %v1166
        %v1180 = vpop.f32.mrf.mxu0
        %v1181 = vadd.f32 0.0, %v1180
        %v1182 = vpop.f32.mrf.mxu0
        %1183 = vdwg.mxu0
        %v1184 = vsel %vm843, %v1124, 0.0
        %v1185 = vsel %vm843, %v1143, 0.0
        %v1186 = vadd.f32 %v1184, %v1185
        %v1187 = vsel %vm843, %v1162, 0.0
        %v1188 = vadd.f32 %v1186, %v1187
        %v1189 = vsel %vm843, %v1181, 0.0
        %v1190 = vadd.f32 %v1188, %v1189
        %v1192 = vperm.slane %v789, 0
        %v1194 = vadd.f32 %v1190, %v1192
        %v1195 = vadd.f32 %v825, %v1194
        %v1196 = vsel %vm843, %v1195, 0.0
        %1197 = vadd.xlane.f32.xlu0 %v1196
        %v1198 = vpop.xlane.xlu0 %1197
        %v1199 = vrcp.pop 32.0
        %v1200 = vmul.f32 32.0, %v1199
        %v1201 = vsub.f32 1.0, %v1200
        %v1202 = vmul.f32 %v1199, %v1201
        %v1203 = vadd.f32 %v1199, %v1202
        %vm1204 = vweird.f32 %v1199
        %v1205 = vsel %vm1204, %v1199, %v1203
        %v1206 = vmul.f32 %v1198, %v1205
        %v1207 = vsub.f32 %v1195, %v1206
        %v1208 = vmul.f32 %v1207, %v1207
        %v1209 = vsel %vm843, %v1208, 0.0
        %1210 = vadd.xlane.f32.xlu0 %v1209
        %v1211 = vpop.xlane.xlu0 %1210
        %v1212 = vmul.f32 %v1211, %v1205
        %v1213 = vadd.f32 %v1212, 1e-05
        %v1214 = vrsqrt.pop %v1213
        %v1215 = vmul.f32 %v1214, %v1213
        %v1216 = vmul.f32 %v1215, %v1214
        %v1217 = vmul.f32 0.5, %v1216
        %v1218 = vsub.f32 1.5, %v1217
        %v1219 = vmul.f32 %v1214, %v1218
        %vm1220 = vweird.f32 %v1213
        %vm1221 = vweird.f32 %v1214
        %vm1222 = vmor %vm1220, %vm1221
        %v1223 = vsel %vm1222, %v1214, %v1219
        %v1224 = vmul.f32 %v1207, %v1223
        %v1226 = vperm.slane %v819, 0
        %v1228 = vmul.f32 %v1224, %v1226
        %v1230 = vperm.slane %v820, 0
        %v1232 = vadd.f32 %v1228, %v1230
        %v1233 = vpack.c.bf16 %v1232, %v1232
        %v1235 = vperm.slane %v794, 0
        %v1241 = vunpack.c.l.b16 %v790
        %v1242 = vunpack.c.l.b16 %v791
        %v1243 = vunpack.c.l.b16 %v792
        %v1244 = vunpack.c.l.b16 %v793
        %v1245 = vpack.c.b16 %v1242, %v1241
        %v1246 = vpack.c.b16 %v1244, %v1243
        %v1250 = vsel %vm843, %v1233, 0
        %1252 = vmatpush.bf16.msra.mxu0 0
        %1253 = vmatpush.bf16.msra.mxu0 0
        %1254 = vmatpush.bf16.msra.mxu0 0
        %1255 = vmatpush.bf16.msra.mxu0 0
        %1256 = vmatpush.bf16.msra.mxu0 0
        %1257 = vmatpush.bf16.msra.mxu0 0
        %1258 = vmatpush.bf16.msra.mxu0 %v1246
        %1259 = vmatpush.bf16.msra.mxu0 %v1245
        %1260 = vmatmul.bf16.gmra.mxu0 %v1250
        %v1261 = vpop.f32.mrf.mxu0
        %v1262 = vadd.f32 %v1235, %v1261
        %v1263 = vpop.f32.mrf.mxu0
        %1264 = vdwg.mxu0
        %v1265 = vpack.c.bf16 %v826, %v826
        %v1267 = vperm.slane %v799, 0
        %v1273 = vunpack.c.l.b16 %v795
        %v1274 = vunpack.c.l.b16 %v796
        %v1275 = vunpack.c.l.b16 %v797
        %v1276 = vunpack.c.l.b16 %v798
        %v1277 = vpack.c.b16 %v1274, %v1273
        %v1278 = vpack.c.b16 %v1276, %v1275
        %v1282 = vsel %vm843, %v1265, 0
        %1284 = vmatpush.bf16.msra.mxu0 0
        %1285 = vmatpush.bf16.msra.mxu0 0
        %1286 = vmatpush.bf16.msra.mxu0 0
        %1287 = vmatpush.bf16.msra.mxu0 0
        %1288 = vmatpush.bf16.msra.mxu0 0
        %1289 = vmatpush.bf16.msra.mxu0 0
        %1290 = vmatpush.bf16.msra.mxu0 %v1278
        %1291 = vmatpush.bf16.msra.mxu0 %v1277
        %1292 = vmatmul.bf16.gmra.mxu0 %v1282
        %v1293 = vpop.f32.mrf.mxu0
        %v1294 = vadd.f32 %v1267, %v1293
        %v1295 = vpop.f32.mrf.mxu0
        %1296 = vdwg.mxu0
        %1298 = vrot.lane.b32.xlu0 %v1262, 120
        %v1299 = vpop.permute.xlu0 %1298
        %1301 = vrot.lane.b32.xlu0 %v1262, 112
        %v1302 = vpop.permute.xlu0 %1301
        %1304 = vrot.lane.b32.xlu0 %v1262, 104
        %v1305 = vpop.permute.xlu0 %1304
        %v1307 = vpack.c.bf16 %v1262, %v1262
        %v1308 = vpack.c.bf16 %v1299, %v1299
        %v1309 = vpack.c.bf16 %v1302, %v1302
        %v1310 = vpack.c.bf16 %v1305, %v1305
        %1312 = vrot.lane.b32.xlu0 %v1294, 120
        %v1313 = vpop.permute.xlu0 %1312
        %1315 = vrot.lane.b32.xlu0 %v1294, 112
        %v1316 = vpop.permute.xlu0 %1315
        %1318 = vrot.lane.b32.xlu0 %v1294, 104
        %v1319 = vpop.permute.xlu0 %1318
        %v1321 = vpack.c.bf16 %v1294, %v1294
        %v1322 = vpack.c.bf16 %v1313, %v1313
        %v1323 = vpack.c.bf16 %v1316, %v1316
        %v1324 = vpack.c.bf16 %v1319, %v1319
        %v1326 = vsel %vm879, %v1307, 0
        %v1329 = vsel %vm879, %v1321, 0
        %1331 = vmatpush.bf16.xpose.msra.mxu0 0
        %1332 = vmatpush.bf16.xpose.msra.mxu0 0
        %1333 = vmatpush.bf16.xpose.msra.mxu0 0
        %1334 = vmatpush.bf16.xpose.msra.mxu0 0
        %1335 = vmatpush.bf16.xpose.msra.mxu0 0
        %1336 = vmatpush.bf16.xpose.msra.mxu0 0
        %1337 = vmatpush.bf16.xpose.msra.mxu0 0
        %1338 = vmatpush.bf16.xpose.msra.mxu0 %v1329
        %1339 = vmatmul.bf16.gmra.mxu0 %v1326
        %v1340 = vpop.f32.mrf.mxu0
        %v1341 = vadd.f32 0.0, %v1340
        %v1342 = vpop.f32.mrf.mxu0
        %1343 = vdwg.mxu0
        %v1345 = vsel %vm879, %v1308, 0
        %v1348 = vsel %vm879, %v1322, 0
        %1350 = vmatpush.bf16.xpose.msra.mxu0 0
        %1351 = vmatpush.bf16.xpose.msra.mxu0 0
        %1352 = vmatpush.bf16.xpose.msra.mxu0 0
        %1353 = vmatpush.bf16.xpose.msra.mxu0 0
        %1354 = vmatpush.bf16.xpose.msra.mxu0 0
        %1355 = vmatpush.bf16.xpose.msra.mxu0 0
        %1356 = vmatpush.bf16.xpose.msra.mxu0 0
        %1357 = vmatpush.bf16.xpose.msra.mxu0 %v1348
        %1358 = vmatmul.bf16.gmra.mxu0 %v1345
        %v1359 = vpop.f32.mrf.mxu0
        %v1360 = vadd.f32 0.0, %v1359
        %v1361 = vpop.f32.mrf.mxu0
        %1362 = vdwg.mxu0
        %v1364 = vsel %vm879, %v1309, 0
        %v1367 = vsel %vm879, %v1323, 0
        %1369 = vmatpush.bf16.xpose.msra.mxu0 0
        %1370 = vmatpush.bf16.xpose.msra.mxu0 0
        %1371 = vmatpush.bf16.xpose.msra.mxu0 0
        %1372 = vmatpush.bf16.xpose.msra.mxu0 0
        %1373 = vmatpush.bf16.xpose.msra.mxu0 0
        %1374 = vmatpush.bf16.xpose.msra.mxu0 0
        %1375 = vmatpush.bf16.xpose.msra.mxu0 0
        %1376 = vmatpush.bf16.xpose.msra.mxu0 %v1367
        %1377 = vmatmul.bf16.gmra.mxu0 %v1364
        %v1378 = vpop.f32.mrf.mxu0
        %v1379 = vadd.f32 0.0, %v1378
        %v1380 = vpop.f32.mrf.mxu0
        %1381 = vdwg.mxu0
        %v1383 = vsel %vm879, %v1310, 0
        %v1386 = vsel %vm879, %v1324, 0
        %1388 = vmatpush.bf16.xpose.msra.mxu0 0
        %1389 = vmatpush.bf16.xpose.msra.mxu0 0
        %1390 = vmatpush.bf16.xpose.msra.mxu0 0
        %1391 = vmatpush.bf16.xpose.msra.mxu0 0
        %1392 = vmatpush.bf16.xpose.msra.mxu0 0
        %1393 = vmatpush.bf16.xpose.msra.mxu0 0
        %1394 = vmatpush.bf16.xpose.msra.mxu0 0
        %1395 = vmatpush.bf16.xpose.msra.mxu0 %v1386
        %1396 = vmatmul.bf16.gmra.mxu0 %v1383
        %v1397 = vpop.f32.mrf.mxu0
        %v1398 = vadd.f32 0.0, %v1397
        %v1399 = vpop.f32.mrf.mxu0
        %1400 = vdwg.mxu0
        %v1401 = vsel %vm879, %v1341, -inf
        %1402 = vmax.xlane.f32.xlu0 %v1401
        %v1403 = vpop.xlane.xlu0 %1402
        %v1404 = vsel %vm879, %v1360, -inf
        %1405 = vmax.xlane.f32.xlu0 %v1404
        %v1406 = vpop.xlane.xlu0 %1405
        %v1407 = vsel %vm879, %v1379, -inf
        %1408 = vmax.xlane.f32.xlu0 %v1407
        %v1409 = vpop.xlane.xlu0 %1408
        %v1410 = vsel %vm879, %v1398, -inf
        %1411 = vmax.xlane.f32.xlu0 %v1410
        %v1412 = vpop.xlane.xlu0 %1411
        %v1413 = vsub.f32 %v1341, %v1403
        %v1414 = vsub.f32 %v1360, %v1406
        %v1415 = vsub.f32 %v1379, %v1409
        %v1416 = vsub.f32 %v1398, %v1412
        %v1417 = vmul.f32 %v1413, 1.442695
        %v1418 = vpow.pop %v1417
        %v1419 = vmul.f32 %v1414, 1.442695
        %v1420 = vpow.pop %v1419
        %v1421 = vmul.f32 %v1415, 1.442695
        %v1422 = vpow.pop %v1421
        %v1423 = vmul.f32 %v1416, 1.442695
        %v1424 = vpow.pop %v1423
        %v1425 = vsel %vm879, %v1418, 0.0
        %1426 = vadd.xlane.f32.xlu0 %v1425
        %v1427 = vpop.xlane.xlu0 %1426
        %v1428 = vsel %vm879, %v1420, 0.0
        %1429 = vadd.xlane.f32.xlu0 %v1428
        %v1430 = vpop.xlane.xlu0 %1429
        %v1431 = vsel %vm879, %v1422, 0.0
        %1432 = vadd.xlane.f32.xlu0 %v1431
        %v1433 = vpop.xlane.xlu0 %1432
        %v1434 = vsel %vm879, %v1424, 0.0
        %1435 = vadd.xlane.f32.xlu0 %v1434
        %v1436 = vpop.xlane.xlu0 %1435
        %v1437 = vrcp.pop %v1427
        %v1438 = vrcp.pop %v1430
        %v1439 = vrcp.pop %v1433
        %v1440 = vrcp.pop %v1436
        %v1441 = vmul.f32 %v1418, %v1437
        %v1442 = vmul.f32 %v1420, %v1438
        %v1443 = vmul.f32 %v1422, %v1439
        %v1444 = vmul.f32 %v1424, %v1440
        %v1445 = vpack.c.bf16 %v1441, %v1441
        %v1446 = vpack.c.bf16 %v1442, %v1442
        %v1447 = vpack.c.bf16 %v1443, %v1443
        %v1448 = vpack.c.bf16 %v1444, %v1444
        %v1450 = vunpack.c.l.b16 %v1321
        %v1451 = vpack.c.b16 %v1450, %v1450
        %1452 = vrot.lane.b32.xlu0 %v1451, 96
        %v1453 = vpop.permute.xlu0 %1452
        %v1455 = vsel %vm879, %v1445, 0
        %v1458 = vsel %vm1024, %v1453, 0
        %1460 = vmatpush.bf16.msra.mxu0 0
        %1461 = vmatpush.bf16.msra.mxu0 0
        %1462 = vmatpush.bf16.msra.mxu0 0
        %1463 = vmatpush.bf16.msra.mxu0 0
        %1464 = vmatpush.bf16.msra.mxu0 0
        %1465 = vmatpush.bf16.msra.mxu0 0
        %1466 = vmatpush.bf16.msra.mxu0 0
        %1467 = vmatpush.bf16.msra.mxu0 %v1458
        %1468 = vmatmul.bf16.gmra.mxu0 %v1455
        %v1469 = vpop.f32.mrf.mxu0
        %v1470 = vadd.f32 0.0, %v1469
        %v1471 = vpop.f32.mrf.mxu0
        %1472 = vdwg.mxu0
        %v1474 = vunpack.c.l.b16 %v1322
        %v1475 = vpack.c.b16 %v1474, %v1474
        %1476 = vrot.lane.b32.xlu0 %v1475, 96
        %v1477 = vpop.permute.xlu0 %1476
        %v1479 = vsel %vm879, %v1446, 0
        %v1482 = vsel %vm1024, %v1477, 0
        %1484 = vmatpush.bf16.msra.mxu0 0
        %1485 = vmatpush.bf16.msra.mxu0 0
        %1486 = vmatpush.bf16.msra.mxu0 0
        %1487 = vmatpush.bf16.msra.mxu0 0
        %1488 = vmatpush.bf16.msra.mxu0 0
        %1489 = vmatpush.bf16.msra.mxu0 0
        %1490 = vmatpush.bf16.msra.mxu0 0
        %1491 = vmatpush.bf16.msra.mxu0 %v1482
        %1492 = vmatmul.bf16.gmra.mxu0 %v1479
        %v1493 = vpop.f32.mrf.mxu0
        %v1494 = vadd.f32 0.0, %v1493
        %v1495 = vpop.f32.mrf.mxu0
        %1496 = vdwg.mxu0
        %v1498 = vunpack.c.l.b16 %v1323
        %v1499 = vpack.c.b16 %v1498, %v1498
        %1500 = vrot.lane.b32.xlu0 %v1499, 96
        %v1501 = vpop.permute.xlu0 %1500
        %v1503 = vsel %vm879, %v1447, 0
        %v1506 = vsel %vm1024, %v1501, 0
        %1508 = vmatpush.bf16.msra.mxu0 0
        %1509 = vmatpush.bf16.msra.mxu0 0
        %1510 = vmatpush.bf16.msra.mxu0 0
        %1511 = vmatpush.bf16.msra.mxu0 0
        %1512 = vmatpush.bf16.msra.mxu0 0
        %1513 = vmatpush.bf16.msra.mxu0 0
        %1514 = vmatpush.bf16.msra.mxu0 0
        %1515 = vmatpush.bf16.msra.mxu0 %v1506
        %1516 = vmatmul.bf16.gmra.mxu0 %v1503
        %v1517 = vpop.f32.mrf.mxu0
        %v1518 = vadd.f32 0.0, %v1517
        %v1519 = vpop.f32.mrf.mxu0
        %1520 = vdwg.mxu0
        %v1522 = vunpack.c.l.b16 %v1324
        %v1523 = vpack.c.b16 %v1522, %v1522
        %1524 = vrot.lane.b32.xlu0 %v1523, 96
        %v1525 = vpop.permute.xlu0 %1524
        %v1527 = vsel %vm879, %v1448, 0
        %v1530 = vsel %vm1024, %v1525, 0
        %1532 = vmatpush.bf16.msra.mxu0 0
        %1533 = vmatpush.bf16.msra.mxu0 0
        %1534 = vmatpush.bf16.msra.mxu0 0
        %1535 = vmatpush.bf16.msra.mxu0 0
        %1536 = vmatpush.bf16.msra.mxu0 0
        %1537 = vmatpush.bf16.msra.mxu0 0
        %1538 = vmatpush.bf16.msra.mxu0 0
        %1539 = vmatpush.bf16.msra.mxu0 %v1530
        %1540 = vmatmul.bf16.gmra.mxu0 %v1527
        %v1541 = vpop.f32.mrf.mxu0
        %v1542 = vadd.f32 0.0, %v1541
        %v1543 = vpop.f32.mrf.mxu0
        %1544 = vdwg.mxu0
        %v1545 = vpack.c.bf16 %v1470, %v1470
        %v1546 = vpack.c.bf16 %v1494, %v1494
        %v1547 = vpack.c.bf16 %v1518, %v1518
        %v1548 = vpack.c.bf16 %v1542, %v1542
        %v1550 = vsel %vm879, %v1545, 0
        %v1553 = vsel %vm1024, %v800, 0
        %1555 = vmatpush.bf16.msra.mxu0 0
        %1556 = vmatpush.bf16.msra.mxu0 0
        %1557 = vmatpush.bf16.msra.mxu0 0
        %1558 = vmatpush.bf16.msra.mxu0 0
        %1559 = vmatpush.bf16.msra.mxu0 0
        %1560 = vmatpush.bf16.msra.mxu0 0
        %1561 = vmatpush.bf16.msra.mxu0 0
        %1562 = vmatpush.bf16.msra.mxu0 %v1553
        %1563 = vmatmul.bf16.gmra.mxu0 %v1550
        %v1564 = vpop.f32.mrf.mxu0
        %v1565 = vadd.f32 0.0, %v1564
        %v1566 = vpop.f32.mrf.mxu0
        %1567 = vdwg.mxu0
        %v1569 = vsel %vm879, %v1546, 0
        %v1572 = vsel %vm1024, %v801, 0
        %1574 = vmatpush.bf16.msra.mxu0 0
        %1575 = vmatpush.bf16.msra.mxu0 0
        %1576 = vmatpush.bf16.msra.mxu0 0
        %1577 = vmatpush.bf16.msra.mxu0 0
        %1578 = vmatpush.bf16.msra.mxu0 0
        %1579 = vmatpush.bf16.msra.mxu0 0
        %1580 = vmatpush.bf16.msra.mxu0 0
        %1581 = vmatpush.bf16.msra.mxu0 %v1572
        %1582 = vmatmul.bf16.gmra.mxu0 %v1569
        %v1583 = vpop.f32.mrf.mxu0
        %v1584 = vadd.f32 0.0, %v1583
        %v1585 = vpop.f32.mrf.mxu0
        %1586 = vdwg.mxu0
        %v1588 = vsel %vm879, %v1547, 0
        %v1591 = vsel %vm1024, %v802, 0
        %1593 = vmatpush.bf16.msra.mxu0 0
        %1594 = vmatpush.bf16.msra.mxu0 0
        %1595 = vmatpush.bf16.msra.mxu0 0
        %1596 = vmatpush.bf16.msra.mxu0 0
        %1597 = vmatpush.bf16.msra.mxu0 0
        %1598 = vmatpush.bf16.msra.mxu0 0
        %1599 = vmatpush.bf16.msra.mxu0 0
        %1600 = vmatpush.bf16.msra.mxu0 %v1591
        %1601 = vmatmul.bf16.gmra.mxu0 %v1588
        %v1602 = vpop.f32.mrf.mxu0
        %v1603 = vadd.f32 0.0, %v1602
        %v1604 = vpop.f32.mrf.mxu0
        %1605 = vdwg.mxu0
        %v1607 = vsel %vm879, %v1548, 0
        %v1610 = vsel %vm1024, %v803, 0
        %1612 = vmatpush.bf16.msra.mxu0 0
        %1613 = vmatpush.bf16.msra.mxu0 0
        %1614 = vmatpush.bf16.msra.mxu0 0
        %1615 = vmatpush.bf16.msra.mxu0 0
        %1616 = vmatpush.bf16.msra.mxu0 0
        %1617 = vmatpush.bf16.msra.mxu0 0
        %1618 = vmatpush.bf16.msra.mxu0 0
        %1619 = vmatpush.bf16.msra.mxu0 %v1610
        %1620 = vmatmul.bf16.gmra.mxu0 %v1607
        %v1621 = vpop.f32.mrf.mxu0
        %v1622 = vadd.f32 0.0, %v1621
        %v1623 = vpop.f32.mrf.mxu0
        %1624 = vdwg.mxu0
        %v1625 = vsel %vm843, %v1565, 0.0
        %v1626 = vsel %vm843, %v1584, 0.0
        %v1627 = vadd.f32 %v1625, %v1626
        %v1628 = vsel %vm843, %v1603, 0.0
        %v1629 = vadd.f32 %v1627, %v1628
        %v1630 = vsel %vm843, %v1622, 0.0
        %v1631 = vadd.f32 %v1629, %v1630
        %v1633 = vperm.slane %v804, 0
        %v1635 = vadd.f32 %v1631, %v1633
        %v1636 = vadd.f32 %v1232, %v1635
        %v1637 = vsel %vm843, %v1636, 0.0
        %1638 = vadd.xlane.f32.xlu0 %v1637
        %v1639 = vpop.xlane.xlu0 %1638
        %v1640 = vmul.f32 %v1639, %v1205
        %v1641 = vsub.f32 %v1636, %v1640
        %v1642 = vmul.f32 %v1641, %v1641
        %v1643 = vsel %vm843, %v1642, 0.0
        %1644 = vadd.xlane.f32.xlu0 %v1643
        %v1645 = vpop.xlane.xlu0 %1644
        %v1646 = vmul.f32 %v1645, %v1205
        %v1647 = vadd.f32 %v1646, 1e-05
        %v1648 = vrsqrt.pop %v1647
        %v1649 = vmul.f32 %v1648, %v1647
        %v1650 = vmul.f32 %v1649, %v1648
        %v1651 = vmul.f32 0.5, %v1650
        %v1652 = vsub.f32 1.5, %v1651
        %v1653 = vmul.f32 %v1648, %v1652
        %vm1654 = vweird.f32 %v1647
        %vm1655 = vweird.f32 %v1648
        %vm1656 = vmor %vm1654, %vm1655
        %v1657 = vsel %vm1656, %v1648, %v1653
        %v1658 = vmul.f32 %v1641, %v1657
        %v1660 = vperm.slane %v821, 0
        %v1662 = vmul.f32 %v1658, %v1660
        %v1664 = vperm.slane %v822, 0
        %v1666 = vadd.f32 %v1662, %v1664
        %v1667 = vpack.c.bf16 %v1666, %v1666
        %v1669 = vperm.slane %v809, 0
        %v1675 = vunpack.c.l.b16 %v805
        %v1676 = vunpack.c.l.b16 %v806
        %v1677 = vunpack.c.l.b16 %v807
        %v1678 = vunpack.c.l.b16 %v808
        %v1679 = vpack.c.b16 %v1676, %v1675
        %v1680 = vpack.c.b16 %v1678, %v1677
        %v1684 = vsel %vm843, %v1667, 0
        %1686 = vmatpush.bf16.msra.mxu0 0
        %1687 = vmatpush.bf16.msra.mxu0 0
        %1688 = vmatpush.bf16.msra.mxu0 0
        %1689 = vmatpush.bf16.msra.mxu0 0
        %1690 = vmatpush.bf16.msra.mxu0 0
        %1691 = vmatpush.bf16.msra.mxu0 0
        %1692 = vmatpush.bf16.msra.mxu0 %v1680
        %1693 = vmatpush.bf16.msra.mxu0 %v1679
        %1694 = vmatmul.bf16.gmra.mxu0 %v1684
        %v1695 = vpop.f32.mrf.mxu0
        %v1696 = vadd.f32 %v1669, %v1695
        %v1697 = vpop.f32.mrf.mxu0
        %1698 = vdwg.mxu0
        %v1699 = vmax.f32 %v1696, 0.0
        %v1700 = vpack.c.bf16 %v1699, %v1699
        %v1709 = vunpack.c.l.b16 %v810
        %v1710 = vunpack.c.l.b16 %v811
        %v1711 = vunpack.c.l.b16 %v812
        %v1712 = vunpack.c.l.b16 %v813
        %v1713 = vunpack.c.l.b16 %v814
        %v1714 = vunpack.c.l.b16 %v815
        %v1715 = vunpack.c.l.b16 %v816
        %v1716 = vunpack.c.l.b16 %v817
        %v1717 = vpack.c.b16 %v1710, %v1709
        %v1718 = vpack.c.b16 %v1712, %v1711
        %v1719 = vpack.c.b16 %v1714, %v1713
        %v1720 = vpack.c.b16 %v1716, %v1715
        %vm1725 = vcmask 523264
        %v1727 = vsel %vm1725, %v1700, 0
        %1729 = vmatpush.bf16.msra.mxu0 0
        %1730 = vmatpush.bf16.msra.mxu0 0
        %1731 = vmatpush.bf16.msra.mxu0 0
        %1732 = vmatpush.bf16.msra.mxu0 0
        %1733 = vmatpush.bf16.msra.mxu0 %v1720
        %1734 = vmatpush.bf16.msra.mxu0 %v1719
        %1735 = vmatpush.bf16.msra.mxu0 %v1718
        %1736 = vmatpush.bf16.msra.mxu0 %v1717
        %1737 = vmatmul.bf16.gmra.mxu0 %v1727
        %v1738 = vpop.f32.mrf.mxu0
        %v1739 = vadd.f32 0.0, %v1738
        %v1740 = vpop.f32.mrf.mxu0
        %1741 = vdwg.mxu0
        %v1742 = vadd.f32 %v1666, %v1739
        %v1744 = vperm.slane %v818, 0
        %v1746 = vadd.f32 %v1742, %v1744
        %v1747 = vsel %vm843, %v1746, 0.0
        %1748 = vadd.xlane.f32.xlu0 %v1747
        %v1749 = vpop.xlane.xlu0 %1748
        %v1750 = vmul.f32 %v1749, %v1205
        %v1751 = vsub.f32 %v1746, %v1750
        %v1752 = vmul.f32 %v1751, %v1751
        %v1753 = vsel %vm843, %v1752, 0.0
        %1754 = vadd.xlane.f32.xlu0 %v1753
        %v1755 = vpop.xlane.xlu0 %1754
        %v1756 = vmul.f32 %v1755, %v1205
        %v1757 = vadd.f32 %v1756, 1e-05
        %v1758 = vrsqrt.pop %v1757
        %v1759 = vmul.f32 %v1758, %v1757
        %v1760 = vmul.f32 %v1759, %v1758
        %v1761 = vmul.f32 0.5, %v1760
        %v1762 = vsub.f32 1.5, %v1761
        %v1763 = vmul.f32 %v1758, %v1762
        %vm1764 = vweird.f32 %v1757
        %vm1765 = vweird.f32 %v1758
        %vm1766 = vmor %vm1764, %vm1765
        %v1767 = vsel %vm1766, %v1758, %v1763
        %v1768 = vmul.f32 %v1751, %v1767
        %v1770 = vperm.slane %v823, 0
        %v1772 = vmul.f32 %v1768, %v1770
        %v1774 = vperm.slane %v824, 0
        %v1776 = vadd.f32 %v1772, %v1774
        %1777 = vst.msk [vmem:[%s770] sm:$0xff] %vm843, %v1776
        %s1778 = sand.u32 %s519, 1
        %s1779 = scalar_lea.sflag [#allocation4], %s1778
        %s1780 = sand.u32 %s519, 1
        %s1781 = smul.addr %s1780, 8
        %s1782 = scalar_lea.vmem [#allocation11], %s1781
        // Predicated region
        $region129: #{tpu_custom_call.1} parent=107 // pred_check
          %p1783 = pneg %p529
        $region130: #{tpu_custom_call.1} parent=107 // pred_check_branch
          %1785 = sbr.rel (%p1783) target = $region132
        $region131: #{tpu_custom_call.1} parent=107 // pred_region
          %1787 = vsyncadd %s1779, 0
          %s1788 = smul.addr %s39, 8
          %s1789 = scalar_lea.hbm %s22, %s1788
          %s1791 = sshll.u32 %s1782, 4
          %s1792 = int_to_ptr.vmem [resolvable:$true] %s1791
          %s1793 = sshll.u32 %s1789, 4
          %s1794 = int_to_ptr.hbm [resolvable:$true] %s1793
          %1796 = dma.vmem_to_hbm [thread:$0]  %s1792, 128, %s1794, %s1779
        $region132: #{tpu_custom_call.1} parent=107 // pred_fallthru
          _
      $region108: #{tpu_custom_call.1} parent=5 // pred_fallthru
        _
      %p1797 = scmp.le.s32.totalorder 2, %s34
      // Predicated region
      $region133: #{tpu_custom_call.1} parent=5 // pred_check
        %p1798 = pneg %p1797
      $region134: #{tpu_custom_call.1} parent=5 // pred_check_branch
        %1800 = sbr.rel (%p1798) target = $region136
      $region135: #{tpu_custom_call.1} parent=5 // pred_region
        %s1801 = ssub.s32 %s34, 2
        // Predicated region
        $region137: #{tpu_custom_call.1} parent=135 // pred_check
          %p1802 = pneg %p535
        $region138: #{tpu_custom_call.1} parent=135 // pred_check_branch
          %1804 = sbr.rel (%p1802) target = $region140
        $region139: #{tpu_custom_call.1} parent=135 // pred_region
          %s1805 = sand.u32 %s520, 1
          %s1806 = scalar_lea.sflag [#allocation4], %s1805
          %s1807 = sand.u32 %s520, 1
          %s1808 = smul.addr %s1807, 8
          %s1809 = scalar_lea.vmem [#allocation11], %s1808
          %1811 = dma.done %s1806, 128
        $region140: #{tpu_custom_call.1} parent=135 // pred_fallthru
          _
      $region136: #{tpu_custom_call.1} parent=5 // pred_fallthru
        _
    $region6: #{tpu_custom_call.1} parent=1 // loop_footer
      %s38 = sadd.s32 1, %s34
    $region7: #{tpu_custom_call.1} parent=1 // loop_footer_branch
      %33 = sbr.rel target = $region3
    $region8: #{tpu_custom_call.1} parent=1 // loop_exit
      _
    %1812 = vsyncpa [#allocation3], 1
    %s1813 = scalar_lea.sflag [#allocation3], 1
    %1814 = vsyncpa %s1813, 1
    %1815 = vsyncpa [#allocation6], 1
    %1816 = vsyncpa [#allocation9], 1
    %1817 = vsyncpa [#allocation4], 1
    %s1818 = scalar_lea.sflag [#allocation4], 1
    %1819 = vsyncpa %s1818, 1

</llo_original>
